<compile_context>
chip_gen: v5e
topology: v5e:2x2
jax: 0.10.0
libtpu: 0.0.40
codegen_flags: <defaults>
</compile_context>

<pallas_src>
from functools import partial

import numpy as np
import jax
import jax.numpy as jnp
from jax import lax
from jax.experimental import pallas as pl
from jax.experimental.pallas import tpu as pltpu

H = 16            # spectral feature length (divisible by 8: three MaxPool(2,1))
NUM_CLASSES = 8
LANE = 128


# --------------------------------------------------------------------------- #
# Kernel
# --------------------------------------------------------------------------- #
def _genre_kernel(x_ref, w1_ref, b1_ref, w2_ref, b2_ref, w3_ref, b3_ref,
                  fc1w_ref, fc1b_ref, fc2w_ref, fc2b_ref, out_ref):
    def conv_block(a, w_ref, b_ref):
        # MXU matmul: bf16 x bf16 -> f32 accumulation, then cast ONCE to bf16
        # so the remaining elementwise work stays on the bf16 VPU path.
        z = jnp.dot(a, w_ref[...], preferred_element_type=jnp.float32)
        z = z.astype(jnp.bfloat16)
        half = z.shape[-1] // 2
        # Lanes are in "pool-split" order: row pairs (2j, 2j+1) sit exactly one
        # half-width apart, so MaxPool2d((2,1)) is one lane-aligned maximum.
        z = jnp.maximum(z[:, :half], z[:, half:])
        # Bias + ReLU AFTER the pool (exactly equivalent: the bias is identical
        # for both pooled rows and relu(max(a,b)) == max(relu(a), relu(b))).
        return jnp.maximum(z + b_ref[...], 0.0)

    y = conv_block(x_ref[...], w1_ref, b1_ref)     # (B, H/2*32)   bf16
    y = conv_block(y, w2_ref, b2_ref)              # (B, H/4*64)   bf16
    y = conv_block(y, w3_ref, b3_ref)              # (B, H/8*128)  bf16

    h1 = jnp.dot(y, fc1w_ref[...], preferred_element_type=jnp.float32)
    h1 = jnp.maximum(h1.astype(jnp.bfloat16) + fc1b_ref[...], 0.0)     # (B,256)
    out_ref[...] = (jnp.dot(h1, fc2w_ref[...],
                            preferred_element_type=jnp.float32)
                    + fc2b_ref[...])                                   # (B,128)


# --------------------------------------------------------------------------- #
# Weight folding (pure NumPy, run ONCE per parameter set)
# --------------------------------------------------------------------------- #
def _split_perm(h_size, c_out):
    """Column permutation: standard (h*C + c) order -> 'pool-split' order where
    row pairs (2j, 2j+1) land exactly half the lane width apart."""
    h = np.arange(h_size)[:, None]
    c = np.arange(c_out)[None, :]
    dest = (h % 2) * (h_size // 2 * c_out) + (h // 2) * c_out + c
    src = np.empty(h_size * c_out, np.int32)
    src[dest.ravel()] = (h * c_out + c).ravel()
    return src                            # W_split[:, d] = W_std[:, src[d]]


def _conv_as_matmul(w_oihw, b, h_size, dtype):
    """Fold a 3x3 conv (only the centre kw column is active, W == 1) into one
    (H*Cin, H*Cout) matmul whose output columns are in pool-split order.
    Returns the matmul weight and a HALF-width bias (applied post-pool)."""
    w = np.asarray(w_oihw, np.float32)
    b = np.asarray(b, np.float32)
    c_out, c_in = int(w.shape[0]), int(w.shape[1])
    wk = w[:, :, :, 1]                                   # (Cout, Cin, 3)
    w_std = np.zeros((h_size * c_in, h_size * c_out), np.float32)
    for kh in range(3):
        # p[h_in, h_out] = 1  iff  h_in == h_out + (kh - 1)  (zero padding)
        p = np.eye(h_size, h_size, k=-(kh - 1), dtype=np.float32)
        w_std += np.kron(p, wk[:, :, kh].T)
    src = _split_perm(h_size, c_out)
    w_split = w_std[:, src]
    half = (h_size * c_out) // 2
    b_half = np.tile(b, h_size)[src][:half].reshape(1, -1)   # post-pool bias
    return jnp.asarray(w_split, dtype), jnp.asarray(b_half, jnp.bfloat16)


def _fc_weights(W1, B1, W2, B2, h_final, dtype):
    W1 = np.asarray(W1, np.float32); B1 = np.asarray(B1, np.float32)
    W2 = np.asarray(W2, np.float32); B2 = np.asarray(B2, np.float32)
    c3 = 128
    flat = h_final * c3
    # Kernel lane order after pool3 is  j*128 + c ;  PyTorch flatten order of
    # (C=128, H=h_final, W=1) is  c*h_final + j  (channel-major).
    p = np.arange(flat)
    src = (p % c3) * h_final + p // c3
    fc1w = np.ascontiguousarray(W1.T)[src, :]                # (flat, 256)
    fc1b = B1.reshape(1, -1)
    nc = int(W2.shape[0])
    fc2w = np.zeros((int(W2.shape[1]), LANE), np.float32); fc2w[:, :nc] = W2.T
    fc2b = np.zeros((1, LANE), np.float32); fc2b[0, :nc] = B2
    return (jnp.asarray(fc1w, dtype), jnp.asarray(fc1b, jnp.bfloat16),
            jnp.asarray(fc2w, dtype), jnp.asarray(fc2b, jnp.float32))


def fold_params(params, h=H, *, dtype=jnp.bfloat16):
    """Fold conv/fc weights into matmul form. Call ONCE per parameter set."""
    w1, b1, w2, b2, w3, b3, W1, B1, W2, B2 = params
    assert h % 8 == 0
    w1k, b1k = _conv_as_matmul(w1, b1, h, dtype)            # (h,       h*32)
    w2k, b2k = _conv_as_matmul(w2, b2, h // 2, dtype)       # (h/2*32,  h/2*64)
    w3k, b3k = _conv_as_matmul(w3, b3, h // 4, dtype)       # (h/4*64,  h/4*128)
    fc1w, fc1b, fc2w, fc2b = _fc_weights(W1, B1, W2, B2, h // 8, dtype)
    return (w1k, b1k, w2k, b2k, w3k, b3k, fc1w, fc1b, fc2w, fc2b)


# --------------------------------------------------------------------------- #
# Forward wrapper
# --------------------------------------------------------------------------- #
def _round_up(a, m):
    return -(-a // m) * m


def _choose_bt(n, b_tile):
    """Batch tile: big enough to amortise per-step overhead, at least 2 grid
    steps for large batches so both v7x TensorCores get work."""
    n16 = _round_up(max(n, 16), 16)
    if n16 <= 256:
        return n16                                   # one tile, minimal padding
    bt = min(b_tile, _round_up(n16 // 2, 256))       # >= 2 steps, 256-multiple
    return max(256, bt)


@partial(jax.jit, static_argnums=(2, 3))
def _apply_jit(x_nchw, folded, num_classes, b_tile):
    (w1k, b1k, w2k, b2k, w3k, b3k, fc1w, fc1b, fc2w, fc2b) = folded
    n, cin, h, w = x_nchw.shape
    assert cin == 1 and w == 1 and h % 8 == 0

    bt = _choose_bt(n, b_tile)
    n_pad = _round_up(n, bt)
    # bf16 streaming input: halves the only per-step HBM->VMEM DMA.
    x = x_nchw.reshape(n, h).astype(jnp.bfloat16)
    if n_pad != n:
        x = jnp.pad(x, ((0, n_pad - n), (0, 0)))

    def const(a):                         # resident weights: constant block idx
        return pl.BlockSpec(a.shape, lambda i: (0, 0))

    out = pl.pallas_call(
        _genre_kernel,
        out_shape=jax.ShapeDtypeStruct((n_pad, LANE), jnp.float32),
        grid=(n_pad // bt,),
        in_specs=[
            pl.BlockSpec((bt, h), lambda i: (i, 0)),
            const(w1k), const(b1k), const(w2k), const(b2k),
            const(w3k), const(b3k),
            const(fc1w), const(fc1b), const(fc2w), const(fc2b),
        ],
        out_specs=pl.BlockSpec((bt, LANE), lambda i: (i, 0)),
        compiler_params=pltpu.CompilerParams(
            dimension_semantics=("parallel",),       # batch tiles independent
            vmem_limit_bytes=64 * 1024 * 1024),      # headroom for bt=1024
    )(x, w1k, b1k, w2k, b2k, w3k, b3k, fc1w, fc1b, fc2w, fc2b)
    return out[:n, :num_classes]


def genre_classifier_apply(x_nchw, folded, num_classes, *, b_tile=1024):
    """Run the forward pass with pre-folded weights (preferred path)."""
    return _apply_jit(x_nchw, folded, int(num_classes), int(b_tile))


def genre_classifier_forward(x_nchw, params, *, b_tile=1024):
    """Convenience path: folds weights (NumPy, cheap) then applies."""
    nc = int(np.asarray(params[8]).shape[0])
    folded = fold_params(params, int(x_nchw.shape[2]))
    return genre_classifier_apply(x_nchw, folded, nc, b_tile=b_tile)


# --------------------------------------------------------------------------- #
# Reference + test
# --------------------------------------------------------------------------- #
def init_params(key, num_classes):
    ks = jax.random.split(key, 10)
    rnd = lambda k, s, sc: jax.random.normal(k, s, jnp.float32) * sc
    w1 = rnd(ks[0], (32, 1, 3, 3), 0.5);     b1 = rnd(ks[1], (32,), 0.1)
    w2 = rnd(ks[2], (64, 32, 3, 3), 0.15);   b2 = rnd(ks[3], (64,), 0.1)
    w3 = rnd(ks[4], (128, 64, 3, 3), 0.1);   b3 = rnd(ks[5], (128,), 0.1)
    W1 = rnd(ks[6], (256, 128 * (H // 8)), 0.1);  B1 = rnd(ks[7], (256,), 0.1)
    W2 = rnd(ks[8], (num_classes, 256), 0.15)
    B2 = rnd(ks[9], (num_classes,), 0.1)
    return (w1, b1, w2, b2, w3, b3, W1, B1, W2, B2)


def reference_forward(x, params):
    """Pure-JAX replica of the PyTorch forward (NCHW, f32)."""
    w1, b1, w2, b2, w3, b3, W1, B1, W2, B2 = params

    def conv(v, w, b):
        y = lax.conv_general_dilated(v, w, (1, 1), ((1, 1), (1, 1)),
                                     dimension_numbers=('NCHW', 'OIHW', 'NCHW'))
        return jax.nn.relu(y + b[None, :, None, None])

    def pool(v):
        return lax.reduce_window(v, -jnp.inf, lax.max,
                                 (1, 1, 2, 1), (1, 1, 2, 1), 'VALID')

    y = pool(conv(x, w1, b1))
    y = pool(conv(y, w2, b2))
    y = pool(conv(y, w3, b3))
    flat = y.reshape(y.shape[0], -1)
    h1 = jax.nn.relu(flat @ W1.T + B1)
    return h1 @ W2.T + B2


if __name__ == "__main__":
    key = jax.random.PRNGKey(0)
    kx, kp = jax.random.split(key)
    batch = 2
    x = jax.random.normal(kx, (batch, 1, H, 1), jnp.float32)   # NCHW, W == 1
    params = init_params(kp, NUM_CLASSES)

    folded = fold_params(params, H)        # weight folding runs ONCE (NumPy)
    out = jax.block_until_ready(genre_classifier_apply(x, folded, NUM_CLASSES))
    ref = jax.block_until_ready(reference_forward(x, params))

    # bf16 matmul operands / elementwise (f32 MXU accumulation) -> few % tol.
    if not np.allclose(np.asarray(out), np.asarray(ref), rtol=5e-2, atol=5e-2):
        raise AssertionError("Pallas kernel output mismatch vs reference")
    print("KERNEL_OK")
</pallas_src>

<mosaic_0001>
module attributes {stable_mosaic.version = 11 : i64} {
  func.func @_genre_kernel(%arg0: i32, %arg1: memref<16x16xbf16, #tpu.memory_space<vmem>>, %arg2: memref<16x512xbf16, #tpu.memory_space<vmem>>, %arg3: memref<1x256xbf16, #tpu.memory_space<vmem>>, %arg4: memref<256x512xbf16, #tpu.memory_space<vmem>>, %arg5: memref<1x256xbf16, #tpu.memory_space<vmem>>, %arg6: memref<256x512xbf16, #tpu.memory_space<vmem>>, %arg7: memref<1x256xbf16, #tpu.memory_space<vmem>>, %arg8: memref<256x256xbf16, #tpu.memory_space<vmem>>, %arg9: memref<1x256xbf16, #tpu.memory_space<vmem>>, %arg10: memref<256x128xbf16, #tpu.memory_space<vmem>>, %arg11: memref<1x128xf32, #tpu.memory_space<vmem>>, %arg12: memref<16x128xf32, #tpu.memory_space<vmem>>) attributes {dimension_semantics = [#tpu.dimension_semantics<parallel>], iteration_bounds = array<i64: 1>, scalar_prefetch = 0 : i64, scratch_operands = 0 : i64, tpu.core_type = #tpu.core_type<tc>, window_params = [{transform_indices = @transform_0, window_bounds = array<i64: 16, 16>}, {pipeline_mode = #tpu.pipeline_mode<synchronous>, transform_indices = @transform_1, window_bounds = array<i64: 16, 512>}, {pipeline_mode = #tpu.pipeline_mode<synchronous>, transform_indices = @transform_2, window_bounds = array<i64: 1, 256>}, {pipeline_mode = #tpu.pipeline_mode<synchronous>, transform_indices = @transform_3, window_bounds = array<i64: 256, 512>}, {pipeline_mode = #tpu.pipeline_mode<synchronous>, transform_indices = @transform_4, window_bounds = array<i64: 1, 256>}, {pipeline_mode = #tpu.pipeline_mode<synchronous>, transform_indices = @transform_5, window_bounds = array<i64: 256, 512>}, {pipeline_mode = #tpu.pipeline_mode<synchronous>, transform_indices = @transform_6, window_bounds = array<i64: 1, 256>}, {pipeline_mode = #tpu.pipeline_mode<synchronous>, transform_indices = @transform_7, window_bounds = array<i64: 256, 256>}, {pipeline_mode = #tpu.pipeline_mode<synchronous>, transform_indices = @transform_8, window_bounds = array<i64: 1, 256>}, {pipeline_mode = #tpu.pipeline_mode<synchronous>, transform_indices = @transform_9, window_bounds = array<i64: 256, 128>}, {pipeline_mode = #tpu.pipeline_mode<synchronous>, transform_indices = @transform_10, window_bounds = array<i64: 1, 128>}, {transform_indices = @transform_11, window_bounds = array<i64: 16, 128>}]} {
    %c0 = arith.constant 0 : index
    %c0_0 = arith.constant 0 : index
    %0 = vector.load %arg1[%c0, %c0_0] : memref<16x16xbf16, #tpu.memory_space<vmem>>, vector<16x16xbf16>
    %c0_1 = arith.constant 0 : index
    %c0_2 = arith.constant 0 : index
    %1 = vector.load %arg2[%c0_1, %c0_2] : memref<16x512xbf16, #tpu.memory_space<vmem>>, vector<16x512xbf16>
    %cst = arith.constant dense<0.000000e+00> : vector<16x512xf32>
    %2 = tpu.matmul %0, %1, %cst {dimension_numbers = #tpu.dot_dimension_numbers<[1], [0], [0], [1], [0, 0, 1, 1], [], []>} : vector<16x16xbf16>, vector<16x512xbf16>, vector<16x512xf32> -> vector<16x512xf32>
    %3 = arith.truncf %2 : vector<16x512xf32> to vector<16x512xbf16>
    %4 = vector.extract_strided_slice %3 {offsets = [0, 0], sizes = [16, 256], strides = [1, 1]} : vector<16x512xbf16> to vector<16x256xbf16>
    %5 = vector.extract_strided_slice %3 {offsets = [0, 256], sizes = [16, 256], strides = [1, 1]} : vector<16x512xbf16> to vector<16x256xbf16>
    %6 = arith.maximumf %4, %5 : vector<16x256xbf16>
    %c0_3 = arith.constant 0 : index
    %c0_4 = arith.constant 0 : index
    %7 = vector.load %arg3[%c0_3, %c0_4] : memref<1x256xbf16, #tpu.memory_space<vmem>>, vector<1x256xbf16>
    %8 = vector.broadcast %7 : vector<1x256xbf16> to vector<16x256xbf16>
    %9 = arith.addf %6, %8 : vector<16x256xbf16>
    %cst_5 = arith.constant 0.000000e+00 : bf16
    %10 = vector.broadcast %cst_5 : bf16 to vector<16x256xbf16>
    %11 = arith.maximumf %9, %10 : vector<16x256xbf16>
    %c0_6 = arith.constant 0 : index
    %c0_7 = arith.constant 0 : index
    %12 = vector.load %arg4[%c0_6, %c0_7] : memref<256x512xbf16, #tpu.memory_space<vmem>>, vector<256x512xbf16>
    %cst_8 = arith.constant dense<0.000000e+00> : vector<16x512xf32>
    %13 = tpu.matmul %11, %12, %cst_8 {dimension_numbers = #tpu.dot_dimension_numbers<[1], [0], [0], [1], [0, 0, 1, 1], [], []>} : vector<16x256xbf16>, vector<256x512xbf16>, vector<16x512xf32> -> vector<16x512xf32>
    %14 = arith.truncf %13 : vector<16x512xf32> to vector<16x512xbf16>
    %15 = vector.extract_strided_slice %14 {offsets = [0, 0], sizes = [16, 256], strides = [1, 1]} : vector<16x512xbf16> to vector<16x256xbf16>
    %16 = vector.extract_strided_slice %14 {offsets = [0, 256], sizes = [16, 256], strides = [1, 1]} : vector<16x512xbf16> to vector<16x256xbf16>
    %17 = arith.maximumf %15, %16 : vector<16x256xbf16>
    %c0_9 = arith.constant 0 : index
    %c0_10 = arith.constant 0 : index
    %18 = vector.load %arg5[%c0_9, %c0_10] : memref<1x256xbf16, #tpu.memory_space<vmem>>, vector<1x256xbf16>
    %19 = vector.broadcast %18 : vector<1x256xbf16> to vector<16x256xbf16>
    %20 = arith.addf %17, %19 : vector<16x256xbf16>
    %cst_11 = arith.constant 0.000000e+00 : bf16
    %21 = vector.broadcast %cst_11 : bf16 to vector<16x256xbf16>
    %22 = arith.maximumf %20, %21 : vector<16x256xbf16>
    %c0_12 = arith.constant 0 : index
    %c0_13 = arith.constant 0 : index
    %23 = vector.load %arg6[%c0_12, %c0_13] : memref<256x512xbf16, #tpu.memory_space<vmem>>, vector<256x512xbf16>
    %cst_14 = arith.constant dense<0.000000e+00> : vector<16x512xf32>
    %24 = tpu.matmul %22, %23, %cst_14 {dimension_numbers = #tpu.dot_dimension_numbers<[1], [0], [0], [1], [0, 0, 1, 1], [], []>} : vector<16x256xbf16>, vector<256x512xbf16>, vector<16x512xf32> -> vector<16x512xf32>
    %25 = arith.truncf %24 : vector<16x512xf32> to vector<16x512xbf16>
    %26 = vector.extract_strided_slice %25 {offsets = [0, 0], sizes = [16, 256], strides = [1, 1]} : vector<16x512xbf16> to vector<16x256xbf16>
    %27 = vector.extract_strided_slice %25 {offsets = [0, 256], sizes = [16, 256], strides = [1, 1]} : vector<16x512xbf16> to vector<16x256xbf16>
    %28 = arith.maximumf %26, %27 : vector<16x256xbf16>
    %c0_15 = arith.constant 0 : index
    %c0_16 = arith.constant 0 : index
    %29 = vector.load %arg7[%c0_15, %c0_16] : memref<1x256xbf16, #tpu.memory_space<vmem>>, vector<1x256xbf16>
    %30 = vector.broadcast %29 : vector<1x256xbf16> to vector<16x256xbf16>
    %31 = arith.addf %28, %30 : vector<16x256xbf16>
    %cst_17 = arith.constant 0.000000e+00 : bf16
    %32 = vector.broadcast %cst_17 : bf16 to vector<16x256xbf16>
    %33 = arith.maximumf %31, %32 : vector<16x256xbf16>
    %c0_18 = arith.constant 0 : index
    %c0_19 = arith.constant 0 : index
    %34 = vector.load %arg8[%c0_18, %c0_19] : memref<256x256xbf16, #tpu.memory_space<vmem>>, vector<256x256xbf16>
    %cst_20 = arith.constant dense<0.000000e+00> : vector<16x256xf32>
    %35 = tpu.matmul %33, %34, %cst_20 {dimension_numbers = #tpu.dot_dimension_numbers<[1], [0], [0], [1], [0, 0, 1, 1], [], []>} : vector<16x256xbf16>, vector<256x256xbf16>, vector<16x256xf32> -> vector<16x256xf32>
    %36 = arith.truncf %35 : vector<16x256xf32> to vector<16x256xbf16>
    %c0_21 = arith.constant 0 : index
    %c0_22 = arith.constant 0 : index
    %37 = vector.load %arg9[%c0_21, %c0_22] : memref<1x256xbf16, #tpu.memory_space<vmem>>, vector<1x256xbf16>
    %38 = vector.broadcast %37 : vector<1x256xbf16> to vector<16x256xbf16>
    %39 = arith.addf %36, %38 : vector<16x256xbf16>
    %cst_23 = arith.constant 0.000000e+00 : bf16
    %40 = vector.broadcast %cst_23 : bf16 to vector<16x256xbf16>
    %41 = arith.maximumf %39, %40 : vector<16x256xbf16>
    %c0_24 = arith.constant 0 : index
    %c0_25 = arith.constant 0 : index
    %42 = vector.load %arg10[%c0_24, %c0_25] : memref<256x128xbf16, #tpu.memory_space<vmem>>, vector<256x128xbf16>
    %cst_26 = arith.constant dense<0.000000e+00> : vector<16x128xf32>
    %43 = tpu.matmul %41, %42, %cst_26 {dimension_numbers = #tpu.dot_dimension_numbers<[1], [0], [0], [1], [0, 0, 1, 1], [], []>} : vector<16x256xbf16>, vector<256x128xbf16>, vector<16x128xf32> -> vector<16x128xf32>
    %c0_27 = arith.constant 0 : index
    %c0_28 = arith.constant 0 : index
    %44 = vector.load %arg11[%c0_27, %c0_28] : memref<1x128xf32, #tpu.memory_space<vmem>>, vector<1x128xf32>
    %45 = vector.broadcast %44 : vector<1x128xf32> to vector<16x128xf32>
    %46 = arith.addf %43, %45 : vector<16x128xf32>
    %c0_29 = arith.constant 0 : index
    %c0_30 = arith.constant 0 : index
    %47 = vector.load %arg12[%c0_29, %c0_30] : memref<16x128xf32, #tpu.memory_space<vmem>>, vector<16x128xf32>
    tpu.vector_store %arg12[%c0_29, %c0_30], %46 {strides = array<i32>} : memref<16x128xf32, #tpu.memory_space<vmem>>, vector<16x128xf32>,
    return
  }
  func.func @transform_0(%arg0: i32) -> (i32, i32) {
    %c0_i32 = arith.constant 0 : i32
    %c0_i32_0 = arith.constant 0 : i32
    return %arg0, %c0_i32 : i32, i32
  }
  func.func @transform_1(%arg0: i32) -> (i32, i32) {
    %c0_i32 = arith.constant 0 : i32
    %c0_i32_0 = arith.constant 0 : i32
    %c0_i32_1 = arith.constant 0 : i32
    return %c0_i32, %c0_i32_0 : i32, i32
  }
  func.func @transform_2(%arg0: i32) -> (i32, i32) {
    %c0_i32 = arith.constant 0 : i32
    %c0_i32_0 = arith.constant 0 : i32
    %c0_i32_1 = arith.constant 0 : i32
    return %c0_i32, %c0_i32_0 : i32, i32
  }
  func.func @transform_3(%arg0: i32) -> (i32, i32) {
    %c0_i32 = arith.constant 0 : i32
    %c0_i32_0 = arith.constant 0 : i32
    %c0_i32_1 = arith.constant 0 : i32
    return %c0_i32, %c0_i32_0 : i32, i32
  }
  func.func @transform_4(%arg0: i32) -> (i32, i32) {
    %c0_i32 = arith.constant 0 : i32
    %c0_i32_0 = arith.constant 0 : i32
    %c0_i32_1 = arith.constant 0 : i32
    return %c0_i32, %c0_i32_0 : i32, i32
  }
  func.func @transform_5(%arg0: i32) -> (i32, i32) {
    %c0_i32 = arith.constant 0 : i32
    %c0_i32_0 = arith.constant 0 : i32
    %c0_i32_1 = arith.constant 0 : i32
    return %c0_i32, %c0_i32_0 : i32, i32
  }
  func.func @transform_6(%arg0: i32) -> (i32, i32) {
    %c0_i32 = arith.constant 0 : i32
    %c0_i32_0 = arith.constant 0 : i32
    %c0_i32_1 = arith.constant 0 : i32
    return %c0_i32, %c0_i32_0 : i32, i32
  }
  func.func @transform_7(%arg0: i32) -> (i32, i32) {
    %c0_i32 = arith.constant 0 : i32
    %c0_i32_0 = arith.constant 0 : i32
    %c0_i32_1 = arith.constant 0 : i32
    return %c0_i32, %c0_i32_0 : i32, i32
  }
  func.func @transform_8(%arg0: i32) -> (i32, i32) {
    %c0_i32 = arith.constant 0 : i32
    %c0_i32_0 = arith.constant 0 : i32
    %c0_i32_1 = arith.constant 0 : i32
    return %c0_i32, %c0_i32_0 : i32, i32
  }
  func.func @transform_9(%arg0: i32) -> (i32, i32) {
    %c0_i32 = arith.constant 0 : i32
    %c0_i32_0 = arith.constant 0 : i32
    %c0_i32_1 = arith.constant 0 : i32
    return %c0_i32, %c0_i32_0 : i32, i32
  }
  func.func @transform_10(%arg0: i32) -> (i32, i32) {
    %c0_i32 = arith.constant 0 : i32
    %c0_i32_0 = arith.constant 0 : i32
    %c0_i32_1 = arith.constant 0 : i32
    return %c0_i32, %c0_i32_0 : i32, i32
  }
  func.func @transform_11(%arg0: i32) -> (i32, i32) {
    %c0_i32 = arith.constant 0 : i32
    %c0_i32_0 = arith.constant 0 : i32
    return %arg0, %c0_i32 : i32, i32
  }
}

</mosaic_0001>

<llo_original>
// kernel: _apply_jit.1
$region0: #{_apply_jit.1}
  #allocation0 [shape = 'u32[]', space=smem, size = 0x4, offset = 0x4, fixed_abs, tag = 'smem constant byte address 0x4 - core index']
  #allocation1 [shape = 'u32[72,128]{1,0:T(1,128)}', space=vmem, size = 0x9000, scoped, tag = 'internal scratch']
  %s0 = inlined_call_operand.vmem [shape: bf16[16,16], index: 0, kind: input, shape index: {}]
  %s1 = inlined_call_operand.hbm [shape: bf16[16,512], index: 1, kind: input, shape index: {}]
  %s2 = inlined_call_operand.vmem [shape: bf16[1,256], index: 2, kind: input, shape index: {}]
  %s3 = inlined_call_operand.hbm [shape: bf16[256,512], index: 3, kind: input, shape index: {}]
  %s4 = inlined_call_operand.vmem [shape: bf16[1,256], index: 4, kind: input, shape index: {}]
  %s5 = inlined_call_operand.hbm [shape: bf16[256,512], index: 5, kind: input, shape index: {}]
  %s6 = inlined_call_operand.vmem [shape: bf16[1,256], index: 6, kind: input, shape index: {}]
  %s7 = inlined_call_operand.hbm [shape: bf16[256,256], index: 7, kind: input, shape index: {}]
  %s8 = inlined_call_operand.vmem [shape: bf16[1,256], index: 8, kind: input, shape index: {}]
  %s9 = inlined_call_operand.hbm [shape: bf16[256,128], index: 9, kind: input, shape index: {}]
  %s10 = inlined_call_operand.vmem [shape: f32[1,128], index: 10, kind: input, shape index: {}]
  %s11 = inlined_call_operand.vmem [shape: f32[16,128], index: 11, kind: output, shape index: {}]
  %s12 = sld [smem:[#allocation0]]
  $region74: #{_apply_jit.1} parent=0
    _
  %s14 = ssub.s32 1, %s12
  %s15 = scalar_select 0, %s14, %s12
  $region1: #{_apply_jit.1} parent=0
    #allocation2 [shape = 'u8[16384]{0}', space=vmem, size = 0x4000, scoped, tag = 'input window, operand 1, single buffered']
    #allocation3 [shape = 's32[1]{0}', space=sflag, size = 0x4, scoped, tag = 'scoped memory for _apply_jit.1']
    #allocation4 [shape = 'u8[262144]{0}', space=vmem, size = 0x40000, scoped, tag = 'input window, operand 3, single buffered']
    #allocation5 [shape = 's32[1]{0}', space=sflag, size = 0x4, scoped, tag = 'scoped memory for _apply_jit.1']
    #allocation6 [shape = 'u8[262144]{0}', space=vmem, size = 0x40000, scoped, tag = 'input window, operand 5, single buffered']
    #allocation7 [shape = 'u8[131072]{0}', space=vmem, size = 0x20000, scoped, tag = 'input window, operand 7, single buffered']
    #allocation8 [shape = 's32[1]{0}', space=sflag, size = 0x4, scoped, tag = 'scoped memory for _apply_jit.1']
    #allocation9 [shape = 'u8[65536]{0}', space=vmem, size = 0x10000, scoped, tag = 'input window, operand 9, single buffered']
    %16 = vsyncpa [#allocation3], 0
    %17 = vsyncpa [#allocation5], 0
    %18 = vsyncpa [#allocation8], 0
    // Predicated region
    $region2: #{_apply_jit.1} parent=1 // pred_check
      _
    $region3: #{_apply_jit.1} parent=1 // pred_check_branch
      %20 = sbr.rel (0) target = $region5
    $region4: #{_apply_jit.1} parent=1 // pred_region
      _
    $region5: #{_apply_jit.1} parent=1 // pred_fallthru
      _
    // Predicated region
    $region6: #{_apply_jit.1} parent=1 // pred_check
      _
    $region7: #{_apply_jit.1} parent=1 // pred_check_branch
      %22 = sbr.rel (0) target = $region9
    $region8: #{_apply_jit.1} parent=1 // pred_region
      %24 = vsyncadd [#allocation3], 0
      %s25 = sshll.u32 %s1, 4
      %s26 = int_to_ptr.hbm [resolvable:$true] %s25
      %s27 = sshll.u32 [#allocation2], 4
      %s28 = int_to_ptr.vmem [resolvable:$true] %s27
      %33 = dma.hbm_to_vmem [thread:$0]  %s26, 512, %s28, [#allocation3], 256, 256, 16
    $region9: #{_apply_jit.1} parent=1 // pred_fallthru
      _
    // Predicated region
    $region10: #{_apply_jit.1} parent=1 // pred_check
      _
    $region11: #{_apply_jit.1} parent=1 // pred_check_branch
      %35 = sbr.rel (0) target = $region13
    $region12: #{_apply_jit.1} parent=1 // pred_region
      _
    $region13: #{_apply_jit.1} parent=1 // pred_fallthru
      _
    // Predicated region
    $region14: #{_apply_jit.1} parent=1 // pred_check
      _
    $region15: #{_apply_jit.1} parent=1 // pred_check_branch
      %37 = sbr.rel (0) target = $region17
    $region16: #{_apply_jit.1} parent=1 // pred_region
      %39 = vsyncadd [#allocation5], 0
      %s40 = sshll.u32 %s3, 4
      %s41 = int_to_ptr.hbm [resolvable:$true] %s40
      %s42 = sshll.u32 [#allocation4], 4
      %s43 = int_to_ptr.vmem [resolvable:$true] %s42
      %48 = dma.hbm_to_vmem [thread:$0]  %s41, 8192, %s43, [#allocation5], 256, 256, 16
    $region17: #{_apply_jit.1} parent=1 // pred_fallthru
      _
    // Predicated region
    $region18: #{_apply_jit.1} parent=1 // pred_check
      _
    $region19: #{_apply_jit.1} parent=1 // pred_check_branch
      %50 = sbr.rel (0) target = $region21
    $region20: #{_apply_jit.1} parent=1 // pred_region
      _
    $region21: #{_apply_jit.1} parent=1 // pred_fallthru
      _
    // Predicated region
    $region22: #{_apply_jit.1} parent=1 // pred_check
      _
    $region23: #{_apply_jit.1} parent=1 // pred_check_branch
      %52 = sbr.rel (0) target = $region25
    $region24: #{_apply_jit.1} parent=1 // pred_region
      %54 = vsyncadd [#allocation5], 0
      %s55 = sshll.u32 %s5, 4
      %s56 = int_to_ptr.hbm [resolvable:$true] %s55
      %s57 = sshll.u32 [#allocation6], 4
      %s58 = int_to_ptr.vmem [resolvable:$true] %s57
      %63 = dma.hbm_to_vmem [thread:$0]  %s56, 8192, %s58, [#allocation5], 256, 256, 16
    $region25: #{_apply_jit.1} parent=1 // pred_fallthru
      _
    // Predicated region
    $region26: #{_apply_jit.1} parent=1 // pred_check
      _
    $region27: #{_apply_jit.1} parent=1 // pred_check_branch
      %65 = sbr.rel (0) target = $region29
    $region28: #{_apply_jit.1} parent=1 // pred_region
      _
    $region29: #{_apply_jit.1} parent=1 // pred_fallthru
      _
    // Predicated region
    $region30: #{_apply_jit.1} parent=1 // pred_check
      _
    $region31: #{_apply_jit.1} parent=1 // pred_check_branch
      %67 = sbr.rel (0) target = $region33
    $region32: #{_apply_jit.1} parent=1 // pred_region
      %69 = vsyncadd [#allocation8], 0
      %s70 = sshll.u32 %s7, 4
      %s71 = int_to_ptr.hbm [resolvable:$true] %s70
      %s72 = sshll.u32 [#allocation7], 4
      %s73 = int_to_ptr.vmem [resolvable:$true] %s72
      %78 = dma.hbm_to_vmem [thread:$0]  %s71, 4096, %s73, [#allocation8], 128, 128, 8
    $region33: #{_apply_jit.1} parent=1 // pred_fallthru
      _
    // Predicated region
    $region34: #{_apply_jit.1} parent=1 // pred_check
      _
    $region35: #{_apply_jit.1} parent=1 // pred_check_branch
      %80 = sbr.rel (0) target = $region37
    $region36: #{_apply_jit.1} parent=1 // pred_region
      _
    $region37: #{_apply_jit.1} parent=1 // pred_fallthru
      _
    // Predicated region
    $region38: #{_apply_jit.1} parent=1 // pred_check
      _
    $region39: #{_apply_jit.1} parent=1 // pred_check_branch
      %82 = sbr.rel (0) target = $region41
    $region40: #{_apply_jit.1} parent=1 // pred_region
      %84 = vsyncadd [#allocation8], 0
      %s85 = sshll.u32 %s9, 4
      %s86 = int_to_ptr.hbm [resolvable:$true] %s85
      %s87 = sshll.u32 [#allocation9], 4
      %s88 = int_to_ptr.vmem [resolvable:$true] %s87
      %93 = dma.hbm_to_vmem [thread:$0]  %s86, 2048, %s88, [#allocation8], 64, 64, 4
    $region41: #{_apply_jit.1} parent=1 // pred_fallthru
      _
    // Predicated region
    $region42: #{_apply_jit.1} parent=1 // pred_check
      _
    $region43: #{_apply_jit.1} parent=1 // pred_check_branch
      %95 = sbr.rel (0) target = $region45
    $region44: #{_apply_jit.1} parent=1 // pred_region
      _
    $region45: #{_apply_jit.1} parent=1 // pred_fallthru
      _
    // Predicated region
    $region46: #{_apply_jit.1} parent=1 // pred_check
      _
    $region47: #{_apply_jit.1} parent=1 // pred_check_branch
      %97 = sbr.rel (0) target = $region49
    $region48: #{_apply_jit.1} parent=1 // pred_region
      %99 = dma.done [#allocation3], 512
    $region49: #{_apply_jit.1} parent=1 // pred_fallthru
      _
    // Predicated region
    $region50: #{_apply_jit.1} parent=1 // pred_check
      _
    $region51: #{_apply_jit.1} parent=1 // pred_check_branch
      %101 = sbr.rel (0) target = $region53
    $region52: #{_apply_jit.1} parent=1 // pred_region
      %103 = dma.done [#allocation5], 8192
    $region53: #{_apply_jit.1} parent=1 // pred_fallthru
      _
    // Predicated region
    $region54: #{_apply_jit.1} parent=1 // pred_check
      _
    $region55: #{_apply_jit.1} parent=1 // pred_check_branch
      %105 = sbr.rel (0) target = $region57
    $region56: #{_apply_jit.1} parent=1 // pred_region
      %107 = dma.done [#allocation5], 8192
    $region57: #{_apply_jit.1} parent=1 // pred_fallthru
      _
    // Predicated region
    $region58: #{_apply_jit.1} parent=1 // pred_check
      _
    $region59: #{_apply_jit.1} parent=1 // pred_check_branch
      %109 = sbr.rel (0) target = $region61
    $region60: #{_apply_jit.1} parent=1 // pred_region
      %111 = dma.done [#allocation8], 4096
    $region61: #{_apply_jit.1} parent=1 // pred_fallthru
      _
    // Predicated region
    $region62: #{_apply_jit.1} parent=1 // pred_check
      _
    $region63: #{_apply_jit.1} parent=1 // pred_check_branch
      %113 = sbr.rel (0) target = $region65
    $region64: #{_apply_jit.1} parent=1 // pred_region
      %115 = dma.done [#allocation8], 2048
    $region65: #{_apply_jit.1} parent=1 // pred_fallthru
      _
    %v117 = vld [vmem:[%s0] sm:$0xf]
    %v118 = vld [vmem:[%s0 + $0x4] sm:$0xf]
    %v119 = vld [vmem:[#allocation2] sm:$0xff]
    %v120 = vld [vmem:[#allocation2 + $0x8] sm:$0xff]
    %v121 = vld [vmem:[#allocation2 + $0x10] sm:$0xff]
    %v122 = vld [vmem:[#allocation2 + $0x18] sm:$0xff]
    %v125 = vunpack.c.l.b16 %v117
    %v126 = vunpack.c.l.b16 %v118
    %v127 = vpack.c.b16 %v126, %v125
    %v132 = vunpack.c.l.b16 %v119
    %v133 = vunpack.c.h.b16 %v119
    %v134 = vunpack.c.l.b16 %v120
    %v135 = vunpack.c.h.b16 %v120
    %v136 = vunpack.c.l.b16 %v121
    %v137 = vunpack.c.h.b16 %v121
    %v138 = vunpack.c.l.b16 %v122
    %v139 = vunpack.c.h.b16 %v122
    %v140 = vpack.c.b16 %v136, %v132
    %v141 = vpack.c.b16 %v137, %v133
    %v142 = vpack.c.b16 %v138, %v134
    %v143 = vpack.c.b16 %v139, %v135
    %vm148 = vcmask 130048
    %v150 = vsel %vm148, %v127, 0
    %152 = vmatpush.bf16.msra.mxu0 0
    %153 = vmatpush.bf16.msra.mxu0 0
    %154 = vmatpush.bf16.msra.mxu0 0
    %155 = vmatpush.bf16.msra.mxu0 0
    %156 = vmatpush.bf16.msra.mxu0 0
    %157 = vmatpush.bf16.msra.mxu0 0
    %158 = vmatpush.bf16.msra.mxu0 0
    %159 = vmatpush.bf16.msra.mxu0 %v140
    %160 = vmatmul.bf16.gmra.mxu0 %v150
    %v161 = vpop.f32.mrf.mxu0
    %v162 = vadd.f32 0.0, %v161
    %v163 = vpop.f32.mrf.mxu0
    %v164 = vadd.f32 0.0, %v163
    %165 = vdwg.mxu0
    %166 = vmatpush.bf16.msra.mxu0 0
    %167 = vmatpush.bf16.msra.mxu0 0
    %168 = vmatpush.bf16.msra.mxu0 0
    %169 = vmatpush.bf16.msra.mxu0 0
    %170 = vmatpush.bf16.msra.mxu0 0
    %171 = vmatpush.bf16.msra.mxu0 0
    %172 = vmatpush.bf16.msra.mxu0 0
    %173 = vmatpush.bf16.msra.mxu0 %v141
    %174 = vmatmul.bf16.gmra.mxu0 %v150
    %v175 = vpop.f32.mrf.mxu0
    %v176 = vadd.f32 0.0, %v175
    %v177 = vpop.f32.mrf.mxu0
    %v178 = vadd.f32 0.0, %v177
    %179 = vdwg.mxu0
    %180 = vmatpush.bf16.msra.mxu0 0
    %181 = vmatpush.bf16.msra.mxu0 0
    %182 = vmatpush.bf16.msra.mxu0 0
    %183 = vmatpush.bf16.msra.mxu0 0
    %184 = vmatpush.bf16.msra.mxu0 0
    %185 = vmatpush.bf16.msra.mxu0 0
    %186 = vmatpush.bf16.msra.mxu0 0
    %187 = vmatpush.bf16.msra.mxu0 %v142
    %188 = vmatmul.bf16.gmra.mxu0 %v150
    %v189 = vpop.f32.mrf.mxu0
    %v190 = vadd.f32 0.0, %v189
    %v191 = vpop.f32.mrf.mxu0
    %v192 = vadd.f32 0.0, %v191
    %193 = vdwg.mxu0
    %194 = vmatpush.bf16.msra.mxu0 0
    %195 = vmatpush.bf16.msra.mxu0 0
    %196 = vmatpush.bf16.msra.mxu0 0
    %197 = vmatpush.bf16.msra.mxu0 0
    %198 = vmatpush.bf16.msra.mxu0 0
    %199 = vmatpush.bf16.msra.mxu0 0
    %200 = vmatpush.bf16.msra.mxu0 0
    %201 = vmatpush.bf16.msra.mxu0 %v143
    %202 = vmatmul.bf16.gmra.mxu0 %v150
    %v203 = vpop.f32.mrf.mxu0
    %v204 = vadd.f32 0.0, %v203
    %v205 = vpop.f32.mrf.mxu0
    %v206 = vadd.f32 0.0, %v205
    %207 = vdwg.mxu0
    %v208 = vpack.c.bf16 %v176, %v162
    %v209 = vpack.c.bf16 %v204, %v190
    %v210 = vpack.c.bf16 %v178, %v164
    %v211 = vpack.c.bf16 %v206, %v192
    %v212 = vunpack.c.l.bf16 %v208
    %v213 = vunpack.c.h.bf16 %v208
    %v214 = vunpack.c.l.bf16 %v210
    %v215 = vunpack.c.h.bf16 %v210
    %v216 = vunpack.c.l.bf16 %v209
    %v217 = vunpack.c.h.bf16 %v209
    %v218 = vunpack.c.l.bf16 %v211
    %v219 = vunpack.c.h.bf16 %v211
    %v220 = vmax.f32 %v212, %v216
    %v221 = vmax.f32 %v213, %v217
    %v222 = vmax.f32 %v214, %v218
    %v223 = vmax.f32 %v215, %v219
    %v224 = vpack.c.bf16 %v221, %v220
    %v225 = vpack.c.bf16 %v223, %v222
    %v226 = vld [vmem:[%s2] sm:$0x3]
    %228 = vst [vmem:[#allocation1] ss:$9 sm:$0xff] %v226
    %v229 = vld [vmem:[#allocation1] sm:$0xff]
    %v230 = vld [vmem:[#allocation1 + $0x9] sm:$0xff]
    %v231 = vpack.i.b16 %v229, %v229
    %v233 = vperm.slane %v231, 0
    %v234 = vpack.i.b16 %v230, %v230
    %v236 = vperm.slane %v234, 0
    %v237 = vunpack.c.l.bf16 %v224
    %v238 = vunpack.c.h.bf16 %v224
    %v239 = vunpack.c.l.bf16 %v225
    %v240 = vunpack.c.h.bf16 %v225
    %v241 = vunpack.c.l.bf16 %v233
    %v242 = vunpack.c.l.bf16 %v236
    %v243 = vadd.f32 %v237, %v241
    %v244 = vadd.f32 %v238, %v242
    %v245 = vadd.f32 %v239, %v241
    %v246 = vadd.f32 %v240, %v242
    %v247 = vpack.c.bf16 %v244, %v243
    %v248 = vpack.c.bf16 %v246, %v245
    %v249 = vunpack.c.l.bf16 %v247
    %v250 = vunpack.c.h.bf16 %v247
    %v251 = vunpack.c.l.bf16 %v248
    %v252 = vunpack.c.h.bf16 %v248
    %v253 = vmax.f32 %v249, 0.0
    %v254 = vmax.f32 %v250, 0.0
    %v255 = vmax.f32 %v251, 0.0
    %v256 = vmax.f32 %v252, 0.0
    %v257 = vpack.c.bf16 %v255, %v253
    %v258 = vpack.c.bf16 %v256, %v254
    %v259 = vld [vmem:[#allocation4] sm:$0xff]
    %v260 = vld [vmem:[#allocation4 + $0x8] sm:$0xff]
    %v261 = vld [vmem:[#allocation4 + $0x10] sm:$0xff]
    %v262 = vld [vmem:[#allocation4 + $0x18] sm:$0xff]
    %v263 = vld [vmem:[#allocation4 + $0x20] sm:$0xff]
    %v264 = vld [vmem:[#allocation4 + $0x28] sm:$0xff]
    %v265 = vld [vmem:[#allocation4 + $0x30] sm:$0xff]
    %v266 = vld [vmem:[#allocation4 + $0x38] sm:$0xff]
    %v267 = vld [vmem:[#allocation4 + $0x40] sm:$0xff]
    %v268 = vld [vmem:[#allocation4 + $0x48] sm:$0xff]
    %v269 = vld [vmem:[#allocation4 + $0x50] sm:$0xff]
    %v270 = vld [vmem:[#allocation4 + $0x58] sm:$0xff]
    %v271 = vld [vmem:[#allocation4 + $0x60] sm:$0xff]
    %v272 = vld [vmem:[#allocation4 + $0x68] sm:$0xff]
    %v273 = vld [vmem:[#allocation4 + $0x70] sm:$0xff]
    %v274 = vld [vmem:[#allocation4 + $0x78] sm:$0xff]
    %v275 = vld [vmem:[#allocation4 + $0x80] sm:$0xff]
    %v276 = vld [vmem:[#allocation4 + $0x88] sm:$0xff]
    %v277 = vld [vmem:[#allocation4 + $0x90] sm:$0xff]
    %v278 = vld [vmem:[#allocation4 + $0x98] sm:$0xff]
    %v279 = vld [vmem:[#allocation4 + $0xa0] sm:$0xff]
    %v280 = vld [vmem:[#allocation4 + $0xa8] sm:$0xff]
    %v281 = vld [vmem:[#allocation4 + $0xb0] sm:$0xff]
    %v282 = vld [vmem:[#allocation4 + $0xb8] sm:$0xff]
    %v283 = vld [vmem:[#allocation4 + $0xc0] sm:$0xff]
    %v284 = vld [vmem:[#allocation4 + $0xc8] sm:$0xff]
    %v285 = vld [vmem:[#allocation4 + $0xd0] sm:$0xff]
    %v286 = vld [vmem:[#allocation4 + $0xd8] sm:$0xff]
    %v287 = vld [vmem:[#allocation4 + $0xe0] sm:$0xff]
    %v288 = vld [vmem:[#allocation4 + $0xe8] sm:$0xff]
    %v289 = vld [vmem:[#allocation4 + $0xf0] sm:$0xff]
    %v290 = vld [vmem:[#allocation4 + $0xf8] sm:$0xff]
    %v291 = vld [vmem:[#allocation4 + $0x100] sm:$0xff]
    %v292 = vld [vmem:[#allocation4 + $0x108] sm:$0xff]
    %v293 = vld [vmem:[#allocation4 + $0x110] sm:$0xff]
    %v294 = vld [vmem:[#allocation4 + $0x118] sm:$0xff]
    %v295 = vld [vmem:[#allocation4 + $0x120] sm:$0xff]
    %v296 = vld [vmem:[#allocation4 + $0x128] sm:$0xff]
    %v297 = vld [vmem:[#allocation4 + $0x130] sm:$0xff]
    %v298 = vld [vmem:[#allocation4 + $0x138] sm:$0xff]
    %v299 = vld [vmem:[#allocation4 + $0x140] sm:$0xff]
    %v300 = vld [vmem:[#allocation4 + $0x148] sm:$0xff]
    %v301 = vld [vmem:[#allocation4 + $0x150] sm:$0xff]
    %v302 = vld [vmem:[#allocation4 + $0x158] sm:$0xff]
    %v303 = vld [vmem:[#allocation4 + $0x160] sm:$0xff]
    %v304 = vld [vmem:[#allocation4 + $0x168] sm:$0xff]
    %v305 = vld [vmem:[#allocation4 + $0x170] sm:$0xff]
    %v306 = vld [vmem:[#allocation4 + $0x178] sm:$0xff]
    %v307 = vld [vmem:[#allocation4 + $0x180] sm:$0xff]
    %v308 = vld [vmem:[#allocation4 + $0x188] sm:$0xff]
    %v309 = vld [vmem:[#allocation4 + $0x190] sm:$0xff]
    %v310 = vld [vmem:[#allocation4 + $0x198] sm:$0xff]
    %v311 = vld [vmem:[#allocation4 + $0x1a0] sm:$0xff]
    %v312 = vld [vmem:[#allocation4 + $0x1a8] sm:$0xff]
    %v313 = vld [vmem:[#allocation4 + $0x1b0] sm:$0xff]
    %v314 = vld [vmem:[#allocation4 + $0x1b8] sm:$0xff]
    %v315 = vld [vmem:[#allocation4 + $0x1c0] sm:$0xff]
    %v316 = vld [vmem:[#allocation4 + $0x1c8] sm:$0xff]
    %v317 = vld [vmem:[#allocation4 + $0x1d0] sm:$0xff]
    %v318 = vld [vmem:[#allocation4 + $0x1d8] sm:$0xff]
    %v319 = vld [vmem:[#allocation4 + $0x1e0] sm:$0xff]
    %v320 = vld [vmem:[#allocation4 + $0x1e8] sm:$0xff]
    %v321 = vld [vmem:[#allocation4 + $0x1f0] sm:$0xff]
    %v322 = vld [vmem:[#allocation4 + $0x1f8] sm:$0xff]
    %v387 = vunpack.c.l.b16 %v259
    %v388 = vunpack.c.h.b16 %v259
    %v389 = vunpack.c.l.b16 %v260
    %v390 = vunpack.c.h.b16 %v260
    %v391 = vunpack.c.l.b16 %v261
    %v392 = vunpack.c.h.b16 %v261
    %v393 = vunpack.c.l.b16 %v262
    %v394 = vunpack.c.h.b16 %v262
    %v395 = vunpack.c.l.b16 %v263
    %v396 = vunpack.c.h.b16 %v263
    %v397 = vunpack.c.l.b16 %v264
    %v398 = vunpack.c.h.b16 %v264
    %v399 = vunpack.c.l.b16 %v265
    %v400 = vunpack.c.h.b16 %v265
    %v401 = vunpack.c.l.b16 %v266
    %v402 = vunpack.c.h.b16 %v266
    %v403 = vunpack.c.l.b16 %v267
    %v404 = vunpack.c.h.b16 %v267
    %v405 = vunpack.c.l.b16 %v268
    %v406 = vunpack.c.h.b16 %v268
    %v407 = vunpack.c.l.b16 %v269
    %v408 = vunpack.c.h.b16 %v269
    %v409 = vunpack.c.l.b16 %v270
    %v410 = vunpack.c.h.b16 %v270
    %v411 = vunpack.c.l.b16 %v271
    %v412 = vunpack.c.h.b16 %v271
    %v413 = vunpack.c.l.b16 %v272
    %v414 = vunpack.c.h.b16 %v272
    %v415 = vunpack.c.l.b16 %v273
    %v416 = vunpack.c.h.b16 %v273
    %v417 = vunpack.c.l.b16 %v274
    %v418 = vunpack.c.h.b16 %v274
    %v419 = vunpack.c.l.b16 %v275
    %v420 = vunpack.c.h.b16 %v275
    %v421 = vunpack.c.l.b16 %v276
    %v422 = vunpack.c.h.b16 %v276
    %v423 = vunpack.c.l.b16 %v277
    %v424 = vunpack.c.h.b16 %v277
    %v425 = vunpack.c.l.b16 %v278
    %v426 = vunpack.c.h.b16 %v278
    %v427 = vunpack.c.l.b16 %v279
    %v428 = vunpack.c.h.b16 %v279
    %v429 = vunpack.c.l.b16 %v280
    %v430 = vunpack.c.h.b16 %v280
    %v431 = vunpack.c.l.b16 %v281
    %v432 = vunpack.c.h.b16 %v281
    %v433 = vunpack.c.l.b16 %v282
    %v434 = vunpack.c.h.b16 %v282
    %v435 = vunpack.c.l.b16 %v283
    %v436 = vunpack.c.h.b16 %v283
    %v437 = vunpack.c.l.b16 %v284
    %v438 = vunpack.c.h.b16 %v284
    %v439 = vunpack.c.l.b16 %v285
    %v440 = vunpack.c.h.b16 %v285
    %v441 = vunpack.c.l.b16 %v286
    %v442 = vunpack.c.h.b16 %v286
    %v443 = vunpack.c.l.b16 %v287
    %v444 = vunpack.c.h.b16 %v287
    %v445 = vunpack.c.l.b16 %v288
    %v446 = vunpack.c.h.b16 %v288
    %v447 = vunpack.c.l.b16 %v289
    %v448 = vunpack.c.h.b16 %v289
    %v449 = vunpack.c.l.b16 %v290
    %v450 = vunpack.c.h.b16 %v290
    %v451 = vunpack.c.l.b16 %v291
    %v452 = vunpack.c.h.b16 %v291
    %v453 = vunpack.c.l.b16 %v292
    %v454 = vunpack.c.h.b16 %v292
    %v455 = vunpack.c.l.b16 %v293
    %v456 = vunpack.c.h.b16 %v293
    %v457 = vunpack.c.l.b16 %v294
    %v458 = vunpack.c.h.b16 %v294
    %v459 = vunpack.c.l.b16 %v295
    %v460 = vunpack.c.h.b16 %v295
    %v461 = vunpack.c.l.b16 %v296
    %v462 = vunpack.c.h.b16 %v296
    %v463 = vunpack.c.l.b16 %v297
    %v464 = vunpack.c.h.b16 %v297
    %v465 = vunpack.c.l.b16 %v298
    %v466 = vunpack.c.h.b16 %v298
    %v467 = vunpack.c.l.b16 %v299
    %v468 = vunpack.c.h.b16 %v299
    %v469 = vunpack.c.l.b16 %v300
    %v470 = vunpack.c.h.b16 %v300
    %v471 = vunpack.c.l.b16 %v301
    %v472 = vunpack.c.h.b16 %v301
    %v473 = vunpack.c.l.b16 %v302
    %v474 = vunpack.c.h.b16 %v302
    %v475 = vunpack.c.l.b16 %v303
    %v476 = vunpack.c.h.b16 %v303
    %v477 = vunpack.c.l.b16 %v304
    %v478 = vunpack.c.h.b16 %v304
    %v479 = vunpack.c.l.b16 %v305
    %v480 = vunpack.c.h.b16 %v305
    %v481 = vunpack.c.l.b16 %v306
    %v482 = vunpack.c.h.b16 %v306
    %v483 = vunpack.c.l.b16 %v307
    %v484 = vunpack.c.h.b16 %v307
    %v485 = vunpack.c.l.b16 %v308
    %v486 = vunpack.c.h.b16 %v308
    %v487 = vunpack.c.l.b16 %v309
    %v488 = vunpack.c.h.b16 %v309
    %v489 = vunpack.c.l.b16 %v310
    %v490 = vunpack.c.h.b16 %v310
    %v491 = vunpack.c.l.b16 %v311
    %v492 = vunpack.c.h.b16 %v311
    %v493 = vunpack.c.l.b16 %v312
    %v494 = vunpack.c.h.b16 %v312
    %v495 = vunpack.c.l.b16 %v313
    %v496 = vunpack.c.h.b16 %v313
    %v497 = vunpack.c.l.b16 %v314
    %v498 = vunpack.c.h.b16 %v314
    %v499 = vunpack.c.l.b16 %v315
    %v500 = vunpack.c.h.b16 %v315
    %v501 = vunpack.c.l.b16 %v316
    %v502 = vunpack.c.h.b16 %v316
    %v503 = vunpack.c.l.b16 %v317
    %v504 = vunpack.c.h.b16 %v317
    %v505 = vunpack.c.l.b16 %v318
    %v506 = vunpack.c.h.b16 %v318
    %v507 = vunpack.c.l.b16 %v319
    %v508 = vunpack.c.h.b16 %v319
    %v509 = vunpack.c.l.b16 %v320
    %v510 = vunpack.c.h.b16 %v320
    %v511 = vunpack.c.l.b16 %v321
    %v512 = vunpack.c.h.b16 %v321
    %v513 = vunpack.c.l.b16 %v322
    %v514 = vunpack.c.h.b16 %v322
    %v515 = vpack.c.b16 %v391, %v387
    %v516 = vpack.c.b16 %v392, %v388
    %v517 = vpack.c.b16 %v393, %v389
    %v518 = vpack.c.b16 %v394, %v390
    %v519 = vpack.c.b16 %v399, %v395
    %v520 = vpack.c.b16 %v400, %v396
    %v521 = vpack.c.b16 %v401, %v397
    %v522 = vpack.c.b16 %v402, %v398
    %v523 = vpack.c.b16 %v407, %v403
    %v524 = vpack.c.b16 %v408, %v404
    %v525 = vpack.c.b16 %v409, %v405
    %v526 = vpack.c.b16 %v410, %v406
    %v527 = vpack.c.b16 %v415, %v411
    %v528 = vpack.c.b16 %v416, %v412
    %v529 = vpack.c.b16 %v417, %v413
    %v530 = vpack.c.b16 %v418, %v414
    %v531 = vpack.c.b16 %v423, %v419
    %v532 = vpack.c.b16 %v424, %v420
    %v533 = vpack.c.b16 %v425, %v421
    %v534 = vpack.c.b16 %v426, %v422
    %v535 = vpack.c.b16 %v431, %v427
    %v536 = vpack.c.b16 %v432, %v428
    %v537 = vpack.c.b16 %v433, %v429
    %v538 = vpack.c.b16 %v434, %v430
    %v539 = vpack.c.b16 %v439, %v435
    %v540 = vpack.c.b16 %v440, %v436
    %v541 = vpack.c.b16 %v441, %v437
    %v542 = vpack.c.b16 %v442, %v438
    %v543 = vpack.c.b16 %v447, %v443
    %v544 = vpack.c.b16 %v448, %v444
    %v545 = vpack.c.b16 %v449, %v445
    %v546 = vpack.c.b16 %v450, %v446
    %v547 = vpack.c.b16 %v455, %v451
    %v548 = vpack.c.b16 %v456, %v452
    %v549 = vpack.c.b16 %v457, %v453
    %v550 = vpack.c.b16 %v458, %v454
    %v551 = vpack.c.b16 %v463, %v459
    %v552 = vpack.c.b16 %v464, %v460
    %v553 = vpack.c.b16 %v465, %v461
    %v554 = vpack.c.b16 %v466, %v462
    %v555 = vpack.c.b16 %v471, %v467
    %v556 = vpack.c.b16 %v472, %v468
    %v557 = vpack.c.b16 %v473, %v469
    %v558 = vpack.c.b16 %v474, %v470
    %v559 = vpack.c.b16 %v479, %v475
    %v560 = vpack.c.b16 %v480, %v476
    %v561 = vpack.c.b16 %v481, %v477
    %v562 = vpack.c.b16 %v482, %v478
    %v563 = vpack.c.b16 %v487, %v483
    %v564 = vpack.c.b16 %v488, %v484
    %v565 = vpack.c.b16 %v489, %v485
    %v566 = vpack.c.b16 %v490, %v486
    %v567 = vpack.c.b16 %v495, %v491
    %v568 = vpack.c.b16 %v496, %v492
    %v569 = vpack.c.b16 %v497, %v493
    %v570 = vpack.c.b16 %v498, %v494
    %v571 = vpack.c.b16 %v503, %v499
    %v572 = vpack.c.b16 %v504, %v500
    %v573 = vpack.c.b16 %v505, %v501
    %v574 = vpack.c.b16 %v506, %v502
    %v575 = vpack.c.b16 %v511, %v507
    %v576 = vpack.c.b16 %v512, %v508
    %v577 = vpack.c.b16 %v513, %v509
    %v578 = vpack.c.b16 %v514, %v510
    %643 = vmatpush.bf16.msra.mxu0 %v543
    %644 = vmatpush.bf16.msra.mxu0 %v539
    %645 = vmatpush.bf16.msra.mxu0 %v535
    %646 = vmatpush.bf16.msra.mxu0 %v531
    %647 = vmatpush.bf16.msra.mxu0 %v527
    %648 = vmatpush.bf16.msra.mxu0 %v523
    %649 = vmatpush.bf16.msra.mxu0 %v519
    %650 = vmatpush.bf16.msra.mxu0 %v515
    %651 = vmatmul.bf16.gmra.mxu0 %v257
    %v652 = vpop.f32.mrf.mxu0
    %v653 = vadd.f32 0.0, %v652
    %v654 = vpop.f32.mrf.mxu0
    %v655 = vadd.f32 0.0, %v654
    %656 = vdwg.mxu0
    %657 = vmatpush.bf16.msra.mxu0 %v575
    %658 = vmatpush.bf16.msra.mxu0 %v571
    %659 = vmatpush.bf16.msra.mxu0 %v567
    %660 = vmatpush.bf16.msra.mxu0 %v563
    %661 = vmatpush.bf16.msra.mxu0 %v559
    %662 = vmatpush.bf16.msra.mxu0 %v555
    %663 = vmatpush.bf16.msra.mxu0 %v551
    %664 = vmatpush.bf16.msra.mxu0 %v547
    %665 = vmatmul.bf16.gmra.mxu0 %v258
    %v666 = vpop.f32.mrf.mxu0
    %v667 = vadd.f32 %v653, %v666
    %v668 = vpop.f32.mrf.mxu0
    %v669 = vadd.f32 %v655, %v668
    %670 = vdwg.mxu0
    %671 = vmatpush.bf16.msra.mxu0 %v544
    %672 = vmatpush.bf16.msra.mxu0 %v540
    %673 = vmatpush.bf16.msra.mxu0 %v536
    %674 = vmatpush.bf16.msra.mxu0 %v532
    %675 = vmatpush.bf16.msra.mxu0 %v528
    %676 = vmatpush.bf16.msra.mxu0 %v524
    %677 = vmatpush.bf16.msra.mxu0 %v520
    %678 = vmatpush.bf16.msra.mxu0 %v516
    %679 = vmatmul.bf16.gmra.mxu0 %v257
    %v680 = vpop.f32.mrf.mxu0
    %v681 = vadd.f32 0.0, %v680
    %v682 = vpop.f32.mrf.mxu0
    %v683 = vadd.f32 0.0, %v682
    %684 = vdwg.mxu0
    %685 = vmatpush.bf16.msra.mxu0 %v576
    %686 = vmatpush.bf16.msra.mxu0 %v572
    %687 = vmatpush.bf16.msra.mxu0 %v568
    %688 = vmatpush.bf16.msra.mxu0 %v564
    %689 = vmatpush.bf16.msra.mxu0 %v560
    %690 = vmatpush.bf16.msra.mxu0 %v556
    %691 = vmatpush.bf16.msra.mxu0 %v552
    %692 = vmatpush.bf16.msra.mxu0 %v548
    %693 = vmatmul.bf16.gmra.mxu0 %v258
    %v694 = vpop.f32.mrf.mxu0
    %v695 = vadd.f32 %v681, %v694
    %v696 = vpop.f32.mrf.mxu0
    %v697 = vadd.f32 %v683, %v696
    %698 = vdwg.mxu0
    %699 = vmatpush.bf16.msra.mxu0 %v545
    %700 = vmatpush.bf16.msra.mxu0 %v541
    %701 = vmatpush.bf16.msra.mxu0 %v537
    %702 = vmatpush.bf16.msra.mxu0 %v533
    %703 = vmatpush.bf16.msra.mxu0 %v529
    %704 = vmatpush.bf16.msra.mxu0 %v525
    %705 = vmatpush.bf16.msra.mxu0 %v521
    %706 = vmatpush.bf16.msra.mxu0 %v517
    %707 = vmatmul.bf16.gmra.mxu0 %v257
    %v708 = vpop.f32.mrf.mxu0
    %v709 = vadd.f32 0.0, %v708
    %v710 = vpop.f32.mrf.mxu0
    %v711 = vadd.f32 0.0, %v710
    %712 = vdwg.mxu0
    %713 = vmatpush.bf16.msra.mxu0 %v577
    %714 = vmatpush.bf16.msra.mxu0 %v573
    %715 = vmatpush.bf16.msra.mxu0 %v569
    %716 = vmatpush.bf16.msra.mxu0 %v565
    %717 = vmatpush.bf16.msra.mxu0 %v561
    %718 = vmatpush.bf16.msra.mxu0 %v557
    %719 = vmatpush.bf16.msra.mxu0 %v553
    %720 = vmatpush.bf16.msra.mxu0 %v549
    %721 = vmatmul.bf16.gmra.mxu0 %v258
    %v722 = vpop.f32.mrf.mxu0
    %v723 = vadd.f32 %v709, %v722
    %v724 = vpop.f32.mrf.mxu0
    %v725 = vadd.f32 %v711, %v724
    %726 = vdwg.mxu0
    %727 = vmatpush.bf16.msra.mxu0 %v546
    %728 = vmatpush.bf16.msra.mxu0 %v542
    %729 = vmatpush.bf16.msra.mxu0 %v538
    %730 = vmatpush.bf16.msra.mxu0 %v534
    %731 = vmatpush.bf16.msra.mxu0 %v530
    %732 = vmatpush.bf16.msra.mxu0 %v526
    %733 = vmatpush.bf16.msra.mxu0 %v522
    %734 = vmatpush.bf16.msra.mxu0 %v518
    %735 = vmatmul.bf16.gmra.mxu0 %v257
    %v736 = vpop.f32.mrf.mxu0
    %v737 = vadd.f32 0.0, %v736
    %v738 = vpop.f32.mrf.mxu0
    %v739 = vadd.f32 0.0, %v738
    %740 = vdwg.mxu0
    %741 = vmatpush.bf16.msra.mxu0 %v578
    %742 = vmatpush.bf16.msra.mxu0 %v574
    %743 = vmatpush.bf16.msra.mxu0 %v570
    %744 = vmatpush.bf16.msra.mxu0 %v566
    %745 = vmatpush.bf16.msra.mxu0 %v562
    %746 = vmatpush.bf16.msra.mxu0 %v558
    %747 = vmatpush.bf16.msra.mxu0 %v554
    %748 = vmatpush.bf16.msra.mxu0 %v550
    %749 = vmatmul.bf16.gmra.mxu0 %v258
    %v750 = vpop.f32.mrf.mxu0
    %v751 = vadd.f32 %v737, %v750
    %v752 = vpop.f32.mrf.mxu0
    %v753 = vadd.f32 %v739, %v752
    %754 = vdwg.mxu0
    %v755 = vpack.c.bf16 %v695, %v667
    %v756 = vpack.c.bf16 %v751, %v723
    %v757 = vpack.c.bf16 %v697, %v669
    %v758 = vpack.c.bf16 %v753, %v725
    %v759 = vunpack.c.l.bf16 %v755
    %v760 = vunpack.c.h.bf16 %v755
    %v761 = vunpack.c.l.bf16 %v757
    %v762 = vunpack.c.h.bf16 %v757
    %v763 = vunpack.c.l.bf16 %v756
    %v764 = vunpack.c.h.bf16 %v756
    %v765 = vunpack.c.l.bf16 %v758
    %v766 = vunpack.c.h.bf16 %v758
    %v767 = vmax.f32 %v759, %v763
    %v768 = vmax.f32 %v760, %v764
    %v769 = vmax.f32 %v761, %v765
    %v770 = vmax.f32 %v762, %v766
    %v771 = vpack.c.bf16 %v768, %v767
    %v772 = vpack.c.bf16 %v770, %v769
    %v773 = vld [vmem:[%s4] sm:$0x3]
    %775 = vst [vmem:[#allocation1] ss:$9 sm:$0xff] %v773
    %v776 = vld [vmem:[#allocation1] sm:$0xff]
    %v777 = vld [vmem:[#allocation1 + $0x9] sm:$0xff]
    %v778 = vpack.i.b16 %v776, %v776
    %v780 = vperm.slane %v778, 0
    %v781 = vpack.i.b16 %v777, %v777
    %v783 = vperm.slane %v781, 0
    %v784 = vunpack.c.l.bf16 %v771
    %v785 = vunpack.c.h.bf16 %v771
    %v786 = vunpack.c.l.bf16 %v772
    %v787 = vunpack.c.h.bf16 %v772
    %v788 = vunpack.c.l.bf16 %v780
    %v789 = vunpack.c.l.bf16 %v783
    %v790 = vadd.f32 %v784, %v788
    %v791 = vadd.f32 %v785, %v789
    %v792 = vadd.f32 %v786, %v788
    %v793 = vadd.f32 %v787, %v789
    %v794 = vpack.c.bf16 %v791, %v790
    %v795 = vpack.c.bf16 %v793, %v792
    %v796 = vunpack.c.l.bf16 %v794
    %v797 = vunpack.c.h.bf16 %v794
    %v798 = vunpack.c.l.bf16 %v795
    %v799 = vunpack.c.h.bf16 %v795
    %v800 = vmax.f32 %v796, 0.0
    %v801 = vmax.f32 %v797, 0.0
    %v802 = vmax.f32 %v798, 0.0
    %v803 = vmax.f32 %v799, 0.0
    %v804 = vpack.c.bf16 %v802, %v800
    %v805 = vpack.c.bf16 %v803, %v801
    %v806 = vld [vmem:[#allocation6] sm:$0xff]
    %v807 = vld [vmem:[#allocation6 + $0x8] sm:$0xff]
    %v808 = vld [vmem:[#allocation6 + $0x10] sm:$0xff]
    %v809 = vld [vmem:[#allocation6 + $0x18] sm:$0xff]
    %v810 = vld [vmem:[#allocation6 + $0x20] sm:$0xff]
    %v811 = vld [vmem:[#allocation6 + $0x28] sm:$0xff]
    %v812 = vld [vmem:[#allocation6 + $0x30] sm:$0xff]
    %v813 = vld [vmem:[#allocation6 + $0x38] sm:$0xff]
    %v814 = vld [vmem:[#allocation6 + $0x40] sm:$0xff]
    %v815 = vld [vmem:[#allocation6 + $0x48] sm:$0xff]
    %v816 = vld [vmem:[#allocation6 + $0x50] sm:$0xff]
    %v817 = vld [vmem:[#allocation6 + $0x58] sm:$0xff]
    %v818 = vld [vmem:[#allocation6 + $0x60] sm:$0xff]
    %v819 = vld [vmem:[#allocation6 + $0x68] sm:$0xff]
    %v820 = vld [vmem:[#allocation6 + $0x70] sm:$0xff]
    %v821 = vld [vmem:[#allocation6 + $0x78] sm:$0xff]
    %v822 = vld [vmem:[#allocation6 + $0x80] sm:$0xff]
    %v823 = vld [vmem:[#allocation6 + $0x88] sm:$0xff]
    %v824 = vld [vmem:[#allocation6 + $0x90] sm:$0xff]
    %v825 = vld [vmem:[#allocation6 + $0x98] sm:$0xff]
    %v826 = vld [vmem:[#allocation6 + $0xa0] sm:$0xff]
    %v827 = vld [vmem:[#allocation6 + $0xa8] sm:$0xff]
    %v828 = vld [vmem:[#allocation6 + $0xb0] sm:$0xff]
    %v829 = vld [vmem:[#allocation6 + $0xb8] sm:$0xff]
    %v830 = vld [vmem:[#allocation6 + $0xc0] sm:$0xff]
    %v831 = vld [vmem:[#allocation6 + $0xc8] sm:$0xff]
    %v832 = vld [vmem:[#allocation6 + $0xd0] sm:$0xff]
    %v833 = vld [vmem:[#allocation6 + $0xd8] sm:$0xff]
    %v834 = vld [vmem:[#allocation6 + $0xe0] sm:$0xff]
    %v835 = vld [vmem:[#allocation6 + $0xe8] sm:$0xff]
    %v836 = vld [vmem:[#allocation6 + $0xf0] sm:$0xff]
    %v837 = vld [vmem:[#allocation6 + $0xf8] sm:$0xff]
    %v838 = vld [vmem:[#allocation6 + $0x100] sm:$0xff]
    %v839 = vld [vmem:[#allocation6 + $0x108] sm:$0xff]
    %v840 = vld [vmem:[#allocation6 + $0x110] sm:$0xff]
    %v841 = vld [vmem:[#allocation6 + $0x118] sm:$0xff]
    %v842 = vld [vmem:[#allocation6 + $0x120] sm:$0xff]
    %v843 = vld [vmem:[#allocation6 + $0x128] sm:$0xff]
    %v844 = vld [vmem:[#allocation6 + $0x130] sm:$0xff]
    %v845 = vld [vmem:[#allocation6 + $0x138] sm:$0xff]
    %v846 = vld [vmem:[#allocation6 + $0x140] sm:$0xff]
    %v847 = vld [vmem:[#allocation6 + $0x148] sm:$0xff]
    %v848 = vld [vmem:[#allocation6 + $0x150] sm:$0xff]
    %v849 = vld [vmem:[#allocation6 + $0x158] sm:$0xff]
    %v850 = vld [vmem:[#allocation6 + $0x160] sm:$0xff]
    %v851 = vld [vmem:[#allocation6 + $0x168] sm:$0xff]
    %v852 = vld [vmem:[#allocation6 + $0x170] sm:$0xff]
    %v853 = vld [vmem:[#allocation6 + $0x178] sm:$0xff]
    %v854 = vld [vmem:[#allocation6 + $0x180] sm:$0xff]
    %v855 = vld [vmem:[#allocation6 + $0x188] sm:$0xff]
    %v856 = vld [vmem:[#allocation6 + $0x190] sm:$0xff]
    %v857 = vld [vmem:[#allocation6 + $0x198] sm:$0xff]
    %v858 = vld [vmem:[#allocation6 + $0x1a0] sm:$0xff]
    %v859 = vld [vmem:[#allocation6 + $0x1a8] sm:$0xff]
    %v860 = vld [vmem:[#allocation6 + $0x1b0] sm:$0xff]
    %v861 = vld [vmem:[#allocation6 + $0x1b8] sm:$0xff]
    %v862 = vld [vmem:[#allocation6 + $0x1c0] sm:$0xff]
    %v863 = vld [vmem:[#allocation6 + $0x1c8] sm:$0xff]
    %v864 = vld [vmem:[#allocation6 + $0x1d0] sm:$0xff]
    %v865 = vld [vmem:[#allocation6 + $0x1d8] sm:$0xff]
    %v866 = vld [vmem:[#allocation6 + $0x1e0] sm:$0xff]
    %v867 = vld [vmem:[#allocation6 + $0x1e8] sm:$0xff]
    %v868 = vld [vmem:[#allocation6 + $0x1f0] sm:$0xff]
    %v869 = vld [vmem:[#allocation6 + $0x1f8] sm:$0xff]
    %v934 = vunpack.c.l.b16 %v806
    %v935 = vunpack.c.h.b16 %v806
    %v936 = vunpack.c.l.b16 %v807
    %v937 = vunpack.c.h.b16 %v807
    %v938 = vunpack.c.l.b16 %v808
    %v939 = vunpack.c.h.b16 %v808
    %v940 = vunpack.c.l.b16 %v809
    %v941 = vunpack.c.h.b16 %v809
    %v942 = vunpack.c.l.b16 %v810
    %v943 = vunpack.c.h.b16 %v810
    %v944 = vunpack.c.l.b16 %v811
    %v945 = vunpack.c.h.b16 %v811
    %v946 = vunpack.c.l.b16 %v812
    %v947 = vunpack.c.h.b16 %v812
    %v948 = vunpack.c.l.b16 %v813
    %v949 = vunpack.c.h.b16 %v813
    %v950 = vunpack.c.l.b16 %v814
    %v951 = vunpack.c.h.b16 %v814
    %v952 = vunpack.c.l.b16 %v815
    %v953 = vunpack.c.h.b16 %v815
    %v954 = vunpack.c.l.b16 %v816
    %v955 = vunpack.c.h.b16 %v816
    %v956 = vunpack.c.l.b16 %v817
    %v957 = vunpack.c.h.b16 %v817
    %v958 = vunpack.c.l.b16 %v818
    %v959 = vunpack.c.h.b16 %v818
    %v960 = vunpack.c.l.b16 %v819
    %v961 = vunpack.c.h.b16 %v819
    %v962 = vunpack.c.l.b16 %v820
    %v963 = vunpack.c.h.b16 %v820
    %v964 = vunpack.c.l.b16 %v821
    %v965 = vunpack.c.h.b16 %v821
    %v966 = vunpack.c.l.b16 %v822
    %v967 = vunpack.c.h.b16 %v822
    %v968 = vunpack.c.l.b16 %v823
    %v969 = vunpack.c.h.b16 %v823
    %v970 = vunpack.c.l.b16 %v824
    %v971 = vunpack.c.h.b16 %v824
    %v972 = vunpack.c.l.b16 %v825
    %v973 = vunpack.c.h.b16 %v825
    %v974 = vunpack.c.l.b16 %v826
    %v975 = vunpack.c.h.b16 %v826
    %v976 = vunpack.c.l.b16 %v827
    %v977 = vunpack.c.h.b16 %v827
    %v978 = vunpack.c.l.b16 %v828
    %v979 = vunpack.c.h.b16 %v828
    %v980 = vunpack.c.l.b16 %v829
    %v981 = vunpack.c.h.b16 %v829
    %v982 = vunpack.c.l.b16 %v830
    %v983 = vunpack.c.h.b16 %v830
    %v984 = vunpack.c.l.b16 %v831
    %v985 = vunpack.c.h.b16 %v831
    %v986 = vunpack.c.l.b16 %v832
    %v987 = vunpack.c.h.b16 %v832
    %v988 = vunpack.c.l.b16 %v833
    %v989 = vunpack.c.h.b16 %v833
    %v990 = vunpack.c.l.b16 %v834
    %v991 = vunpack.c.h.b16 %v834
    %v992 = vunpack.c.l.b16 %v835
    %v993 = vunpack.c.h.b16 %v835
    %v994 = vunpack.c.l.b16 %v836
    %v995 = vunpack.c.h.b16 %v836
    %v996 = vunpack.c.l.b16 %v837
    %v997 = vunpack.c.h.b16 %v837
    %v998 = vunpack.c.l.b16 %v838
    %v999 = vunpack.c.h.b16 %v838
    %v1000 = vunpack.c.l.b16 %v839
    %v1001 = vunpack.c.h.b16 %v839
    %v1002 = vunpack.c.l.b16 %v840
    %v1003 = vunpack.c.h.b16 %v840
    %v1004 = vunpack.c.l.b16 %v841
    %v1005 = vunpack.c.h.b16 %v841
    %v1006 = vunpack.c.l.b16 %v842
    %v1007 = vunpack.c.h.b16 %v842
    %v1008 = vunpack.c.l.b16 %v843
    %v1009 = vunpack.c.h.b16 %v843
    %v1010 = vunpack.c.l.b16 %v844
    %v1011 = vunpack.c.h.b16 %v844
    %v1012 = vunpack.c.l.b16 %v845
    %v1013 = vunpack.c.h.b16 %v845
    %v1014 = vunpack.c.l.b16 %v846
    %v1015 = vunpack.c.h.b16 %v846
    %v1016 = vunpack.c.l.b16 %v847
    %v1017 = vunpack.c.h.b16 %v847
    %v1018 = vunpack.c.l.b16 %v848
    %v1019 = vunpack.c.h.b16 %v848
    %v1020 = vunpack.c.l.b16 %v849
    %v1021 = vunpack.c.h.b16 %v849
    %v1022 = vunpack.c.l.b16 %v850
    %v1023 = vunpack.c.h.b16 %v850
    %v1024 = vunpack.c.l.b16 %v851
    %v1025 = vunpack.c.h.b16 %v851
    %v1026 = vunpack.c.l.b16 %v852
    %v1027 = vunpack.c.h.b16 %v852
    %v1028 = vunpack.c.l.b16 %v853
    %v1029 = vunpack.c.h.b16 %v853
    %v1030 = vunpack.c.l.b16 %v854
    %v1031 = vunpack.c.h.b16 %v854
    %v1032 = vunpack.c.l.b16 %v855
    %v1033 = vunpack.c.h.b16 %v855
    %v1034 = vunpack.c.l.b16 %v856
    %v1035 = vunpack.c.h.b16 %v856
    %v1036 = vunpack.c.l.b16 %v857
    %v1037 = vunpack.c.h.b16 %v857
    %v1038 = vunpack.c.l.b16 %v858
    %v1039 = vunpack.c.h.b16 %v858
    %v1040 = vunpack.c.l.b16 %v859
    %v1041 = vunpack.c.h.b16 %v859
    %v1042 = vunpack.c.l.b16 %v860
    %v1043 = vunpack.c.h.b16 %v860
    %v1044 = vunpack.c.l.b16 %v861
    %v1045 = vunpack.c.h.b16 %v861
    %v1046 = vunpack.c.l.b16 %v862
    %v1047 = vunpack.c.h.b16 %v862
    %v1048 = vunpack.c.l.b16 %v863
    %v1049 = vunpack.c.h.b16 %v863
    %v1050 = vunpack.c.l.b16 %v864
    %v1051 = vunpack.c.h.b16 %v864
    %v1052 = vunpack.c.l.b16 %v865
    %v1053 = vunpack.c.h.b16 %v865
    %v1054 = vunpack.c.l.b16 %v866
    %v1055 = vunpack.c.h.b16 %v866
    %v1056 = vunpack.c.l.b16 %v867
    %v1057 = vunpack.c.h.b16 %v867
    %v1058 = vunpack.c.l.b16 %v868
    %v1059 = vunpack.c.h.b16 %v868
    %v1060 = vunpack.c.l.b16 %v869
    %v1061 = vunpack.c.h.b16 %v869
    %v1062 = vpack.c.b16 %v938, %v934
    %v1063 = vpack.c.b16 %v939, %v935
    %v1064 = vpack.c.b16 %v940, %v936
    %v1065 = vpack.c.b16 %v941, %v937
    %v1066 = vpack.c.b16 %v946, %v942
    %v1067 = vpack.c.b16 %v947, %v943
    %v1068 = vpack.c.b16 %v948, %v944
    %v1069 = vpack.c.b16 %v949, %v945
    %v1070 = vpack.c.b16 %v954, %v950
    %v1071 = vpack.c.b16 %v955, %v951
    %v1072 = vpack.c.b16 %v956, %v952
    %v1073 = vpack.c.b16 %v957, %v953
    %v1074 = vpack.c.b16 %v962, %v958
    %v1075 = vpack.c.b16 %v963, %v959
    %v1076 = vpack.c.b16 %v964, %v960
    %v1077 = vpack.c.b16 %v965, %v961
    %v1078 = vpack.c.b16 %v970, %v966
    %v1079 = vpack.c.b16 %v971, %v967
    %v1080 = vpack.c.b16 %v972, %v968
    %v1081 = vpack.c.b16 %v973, %v969
    %v1082 = vpack.c.b16 %v978, %v974
    %v1083 = vpack.c.b16 %v979, %v975
    %v1084 = vpack.c.b16 %v980, %v976
    %v1085 = vpack.c.b16 %v981, %v977
    %v1086 = vpack.c.b16 %v986, %v982
    %v1087 = vpack.c.b16 %v987, %v983
    %v1088 = vpack.c.b16 %v988, %v984
    %v1089 = vpack.c.b16 %v989, %v985
    %v1090 = vpack.c.b16 %v994, %v990
    %v1091 = vpack.c.b16 %v995, %v991
    %v1092 = vpack.c.b16 %v996, %v992
    %v1093 = vpack.c.b16 %v997, %v993
    %v1094 = vpack.c.b16 %v1002, %v998
    %v1095 = vpack.c.b16 %v1003, %v999
    %v1096 = vpack.c.b16 %v1004, %v1000
    %v1097 = vpack.c.b16 %v1005, %v1001
    %v1098 = vpack.c.b16 %v1010, %v1006
    %v1099 = vpack.c.b16 %v1011, %v1007
    %v1100 = vpack.c.b16 %v1012, %v1008
    %v1101 = vpack.c.b16 %v1013, %v1009
    %v1102 = vpack.c.b16 %v1018, %v1014
    %v1103 = vpack.c.b16 %v1019, %v1015
    %v1104 = vpack.c.b16 %v1020, %v1016
    %v1105 = vpack.c.b16 %v1021, %v1017
    %v1106 = vpack.c.b16 %v1026, %v1022
    %v1107 = vpack.c.b16 %v1027, %v1023
    %v1108 = vpack.c.b16 %v1028, %v1024
    %v1109 = vpack.c.b16 %v1029, %v1025
    %v1110 = vpack.c.b16 %v1034, %v1030
    %v1111 = vpack.c.b16 %v1035, %v1031
    %v1112 = vpack.c.b16 %v1036, %v1032
    %v1113 = vpack.c.b16 %v1037, %v1033
    %v1114 = vpack.c.b16 %v1042, %v1038
    %v1115 = vpack.c.b16 %v1043, %v1039
    %v1116 = vpack.c.b16 %v1044, %v1040
    %v1117 = vpack.c.b16 %v1045, %v1041
    %v1118 = vpack.c.b16 %v1050, %v1046
    %v1119 = vpack.c.b16 %v1051, %v1047
    %v1120 = vpack.c.b16 %v1052, %v1048
    %v1121 = vpack.c.b16 %v1053, %v1049
    %v1122 = vpack.c.b16 %v1058, %v1054
    %v1123 = vpack.c.b16 %v1059, %v1055
    %v1124 = vpack.c.b16 %v1060, %v1056
    %v1125 = vpack.c.b16 %v1061, %v1057
    %1190 = vmatpush.bf16.msra.mxu0 %v1090
    %1191 = vmatpush.bf16.msra.mxu0 %v1086
    %1192 = vmatpush.bf16.msra.mxu0 %v1082
    %1193 = vmatpush.bf16.msra.mxu0 %v1078
    %1194 = vmatpush.bf16.msra.mxu0 %v1074
    %1195 = vmatpush.bf16.msra.mxu0 %v1070
    %1196 = vmatpush.bf16.msra.mxu0 %v1066
    %1197 = vmatpush.bf16.msra.mxu0 %v1062
    %1198 = vmatmul.bf16.gmra.mxu0 %v804
    %v1199 = vpop.f32.mrf.mxu0
    %v1200 = vadd.f32 0.0, %v1199
    %v1201 = vpop.f32.mrf.mxu0
    %v1202 = vadd.f32 0.0, %v1201
    %1203 = vdwg.mxu0
    %1204 = vmatpush.bf16.msra.mxu0 %v1122
    %1205 = vmatpush.bf16.msra.mxu0 %v1118
    %1206 = vmatpush.bf16.msra.mxu0 %v1114
    %1207 = vmatpush.bf16.msra.mxu0 %v1110
    %1208 = vmatpush.bf16.msra.mxu0 %v1106
    %1209 = vmatpush.bf16.msra.mxu0 %v1102
    %1210 = vmatpush.bf16.msra.mxu0 %v1098
    %1211 = vmatpush.bf16.msra.mxu0 %v1094
    %1212 = vmatmul.bf16.gmra.mxu0 %v805
    %v1213 = vpop.f32.mrf.mxu0
    %v1214 = vadd.f32 %v1200, %v1213
    %v1215 = vpop.f32.mrf.mxu0
    %v1216 = vadd.f32 %v1202, %v1215
    %1217 = vdwg.mxu0
    %1218 = vmatpush.bf16.msra.mxu0 %v1091
    %1219 = vmatpush.bf16.msra.mxu0 %v1087
    %1220 = vmatpush.bf16.msra.mxu0 %v1083
    %1221 = vmatpush.bf16.msra.mxu0 %v1079
    %1222 = vmatpush.bf16.msra.mxu0 %v1075
    %1223 = vmatpush.bf16.msra.mxu0 %v1071
    %1224 = vmatpush.bf16.msra.mxu0 %v1067
    %1225 = vmatpush.bf16.msra.mxu0 %v1063
    %1226 = vmatmul.bf16.gmra.mxu0 %v804
    %v1227 = vpop.f32.mrf.mxu0
    %v1228 = vadd.f32 0.0, %v1227
    %v1229 = vpop.f32.mrf.mxu0
    %v1230 = vadd.f32 0.0, %v1229
    %1231 = vdwg.mxu0
    %1232 = vmatpush.bf16.msra.mxu0 %v1123
    %1233 = vmatpush.bf16.msra.mxu0 %v1119
    %1234 = vmatpush.bf16.msra.mxu0 %v1115
    %1235 = vmatpush.bf16.msra.mxu0 %v1111
    %1236 = vmatpush.bf16.msra.mxu0 %v1107
    %1237 = vmatpush.bf16.msra.mxu0 %v1103
    %1238 = vmatpush.bf16.msra.mxu0 %v1099
    %1239 = vmatpush.bf16.msra.mxu0 %v1095
    %1240 = vmatmul.bf16.gmra.mxu0 %v805
    %v1241 = vpop.f32.mrf.mxu0
    %v1242 = vadd.f32 %v1228, %v1241
    %v1243 = vpop.f32.mrf.mxu0
    %v1244 = vadd.f32 %v1230, %v1243
    %1245 = vdwg.mxu0
    %1246 = vmatpush.bf16.msra.mxu0 %v1092
    %1247 = vmatpush.bf16.msra.mxu0 %v1088
    %1248 = vmatpush.bf16.msra.mxu0 %v1084
    %1249 = vmatpush.bf16.msra.mxu0 %v1080
    %1250 = vmatpush.bf16.msra.mxu0 %v1076
    %1251 = vmatpush.bf16.msra.mxu0 %v1072
    %1252 = vmatpush.bf16.msra.mxu0 %v1068
    %1253 = vmatpush.bf16.msra.mxu0 %v1064
    %1254 = vmatmul.bf16.gmra.mxu0 %v804
    %v1255 = vpop.f32.mrf.mxu0
    %v1256 = vadd.f32 0.0, %v1255
    %v1257 = vpop.f32.mrf.mxu0
    %v1258 = vadd.f32 0.0, %v1257
    %1259 = vdwg.mxu0
    %1260 = vmatpush.bf16.msra.mxu0 %v1124
    %1261 = vmatpush.bf16.msra.mxu0 %v1120
    %1262 = vmatpush.bf16.msra.mxu0 %v1116
    %1263 = vmatpush.bf16.msra.mxu0 %v1112
    %1264 = vmatpush.bf16.msra.mxu0 %v1108
    %1265 = vmatpush.bf16.msra.mxu0 %v1104
    %1266 = vmatpush.bf16.msra.mxu0 %v1100
    %1267 = vmatpush.bf16.msra.mxu0 %v1096
    %1268 = vmatmul.bf16.gmra.mxu0 %v805
    %v1269 = vpop.f32.mrf.mxu0
    %v1270 = vadd.f32 %v1256, %v1269
    %v1271 = vpop.f32.mrf.mxu0
    %v1272 = vadd.f32 %v1258, %v1271
    %1273 = vdwg.mxu0
    %1274 = vmatpush.bf16.msra.mxu0 %v1093
    %1275 = vmatpush.bf16.msra.mxu0 %v1089
    %1276 = vmatpush.bf16.msra.mxu0 %v1085
    %1277 = vmatpush.bf16.msra.mxu0 %v1081
    %1278 = vmatpush.bf16.msra.mxu0 %v1077
    %1279 = vmatpush.bf16.msra.mxu0 %v1073
    %1280 = vmatpush.bf16.msra.mxu0 %v1069
    %1281 = vmatpush.bf16.msra.mxu0 %v1065
    %1282 = vmatmul.bf16.gmra.mxu0 %v804
    %v1283 = vpop.f32.mrf.mxu0
    %v1284 = vadd.f32 0.0, %v1283
    %v1285 = vpop.f32.mrf.mxu0
    %v1286 = vadd.f32 0.0, %v1285
    %1287 = vdwg.mxu0
    %1288 = vmatpush.bf16.msra.mxu0 %v1125
    %1289 = vmatpush.bf16.msra.mxu0 %v1121
    %1290 = vmatpush.bf16.msra.mxu0 %v1117
    %1291 = vmatpush.bf16.msra.mxu0 %v1113
    %1292 = vmatpush.bf16.msra.mxu0 %v1109
    %1293 = vmatpush.bf16.msra.mxu0 %v1105
    %1294 = vmatpush.bf16.msra.mxu0 %v1101
    %1295 = vmatpush.bf16.msra.mxu0 %v1097
    %1296 = vmatmul.bf16.gmra.mxu0 %v805
    %v1297 = vpop.f32.mrf.mxu0
    %v1298 = vadd.f32 %v1284, %v1297
    %v1299 = vpop.f32.mrf.mxu0
    %v1300 = vadd.f32 %v1286, %v1299
    %1301 = vdwg.mxu0
    %v1302 = vpack.c.bf16 %v1242, %v1214
    %v1303 = vpack.c.bf16 %v1298, %v1270
    %v1304 = vpack.c.bf16 %v1244, %v1216
    %v1305 = vpack.c.bf16 %v1300, %v1272
    %v1306 = vunpack.c.l.bf16 %v1302
    %v1307 = vunpack.c.h.bf16 %v1302
    %v1308 = vunpack.c.l.bf16 %v1304
    %v1309 = vunpack.c.h.bf16 %v1304
    %v1310 = vunpack.c.l.bf16 %v1303
    %v1311 = vunpack.c.h.bf16 %v1303
    %v1312 = vunpack.c.l.bf16 %v1305
    %v1313 = vunpack.c.h.bf16 %v1305
    %v1314 = vmax.f32 %v1306, %v1310
    %v1315 = vmax.f32 %v1307, %v1311
    %v1316 = vmax.f32 %v1308, %v1312
    %v1317 = vmax.f32 %v1309, %v1313
    %v1318 = vpack.c.bf16 %v1315, %v1314
    %v1319 = vpack.c.bf16 %v1317, %v1316
    %v1320 = vld [vmem:[%s6] sm:$0x3]
    %1322 = vst [vmem:[#allocation1] ss:$9 sm:$0xff] %v1320
    %v1323 = vld [vmem:[#allocation1] sm:$0xff]
    %v1324 = vld [vmem:[#allocation1 + $0x9] sm:$0xff]
    %v1325 = vpack.i.b16 %v1323, %v1323
    %v1327 = vperm.slane %v1325, 0
    %v1328 = vpack.i.b16 %v1324, %v1324
    %v1330 = vperm.slane %v1328, 0
    %v1331 = vunpack.c.l.bf16 %v1318
    %v1332 = vunpack.c.h.bf16 %v1318
    %v1333 = vunpack.c.l.bf16 %v1319
    %v1334 = vunpack.c.h.bf16 %v1319
    %v1335 = vunpack.c.l.bf16 %v1327
    %v1336 = vunpack.c.l.bf16 %v1330
    %v1337 = vadd.f32 %v1331, %v1335
    %v1338 = vadd.f32 %v1332, %v1336
    %v1339 = vadd.f32 %v1333, %v1335
    %v1340 = vadd.f32 %v1334, %v1336
    %v1341 = vpack.c.bf16 %v1338, %v1337
    %v1342 = vpack.c.bf16 %v1340, %v1339
    %v1343 = vunpack.c.l.bf16 %v1341
    %v1344 = vunpack.c.h.bf16 %v1341
    %v1345 = vunpack.c.l.bf16 %v1342
    %v1346 = vunpack.c.h.bf16 %v1342
    %v1347 = vmax.f32 %v1343, 0.0
    %v1348 = vmax.f32 %v1344, 0.0
    %v1349 = vmax.f32 %v1345, 0.0
    %v1350 = vmax.f32 %v1346, 0.0
    %v1351 = vpack.c.bf16 %v1349, %v1347
    %v1352 = vpack.c.bf16 %v1350, %v1348
    %v1353 = vld [vmem:[#allocation7] sm:$0xff]
    %v1354 = vld [vmem:[#allocation7 + $0x8] sm:$0xff]
    %v1355 = vld [vmem:[#allocation7 + $0x10] sm:$0xff]
    %v1356 = vld [vmem:[#allocation7 + $0x18] sm:$0xff]
    %v1357 = vld [vmem:[#allocation7 + $0x20] sm:$0xff]
    %v1358 = vld [vmem:[#allocation7 + $0x28] sm:$0xff]
    %v1359 = vld [vmem:[#allocation7 + $0x30] sm:$0xff]
    %v1360 = vld [vmem:[#allocation7 + $0x38] sm:$0xff]
    %v1361 = vld [vmem:[#allocation7 + $0x40] sm:$0xff]
    %v1362 = vld [vmem:[#allocation7 + $0x48] sm:$0xff]
    %v1363 = vld [vmem:[#allocation7 + $0x50] sm:$0xff]
    %v1364 = vld [vmem:[#allocation7 + $0x58] sm:$0xff]
    %v1365 = vld [vmem:[#allocation7 + $0x60] sm:$0xff]
    %v1366 = vld [vmem:[#allocation7 + $0x68] sm:$0xff]
    %v1367 = vld [vmem:[#allocation7 + $0x70] sm:$0xff]
    %v1368 = vld [vmem:[#allocation7 + $0x78] sm:$0xff]
    %v1369 = vld [vmem:[#allocation7 + $0x80] sm:$0xff]
    %v1370 = vld [vmem:[#allocation7 + $0x88] sm:$0xff]
    %v1371 = vld [vmem:[#allocation7 + $0x90] sm:$0xff]
    %v1372 = vld [vmem:[#allocation7 + $0x98] sm:$0xff]
    %v1373 = vld [vmem:[#allocation7 + $0xa0] sm:$0xff]
    %v1374 = vld [vmem:[#allocation7 + $0xa8] sm:$0xff]
    %v1375 = vld [vmem:[#allocation7 + $0xb0] sm:$0xff]
    %v1376 = vld [vmem:[#allocation7 + $0xb8] sm:$0xff]
    %v1377 = vld [vmem:[#allocation7 + $0xc0] sm:$0xff]
    %v1378 = vld [vmem:[#allocation7 + $0xc8] sm:$0xff]
    %v1379 = vld [vmem:[#allocation7 + $0xd0] sm:$0xff]
    %v1380 = vld [vmem:[#allocation7 + $0xd8] sm:$0xff]
    %v1381 = vld [vmem:[#allocation7 + $0xe0] sm:$0xff]
    %v1382 = vld [vmem:[#allocation7 + $0xe8] sm:$0xff]
    %v1383 = vld [vmem:[#allocation7 + $0xf0] sm:$0xff]
    %v1384 = vld [vmem:[#allocation7 + $0xf8] sm:$0xff]
    %v1417 = vunpack.c.l.b16 %v1353
    %v1418 = vunpack.c.h.b16 %v1353
    %v1419 = vunpack.c.l.b16 %v1354
    %v1420 = vunpack.c.h.b16 %v1354
    %v1421 = vunpack.c.l.b16 %v1355
    %v1422 = vunpack.c.h.b16 %v1355
    %v1423 = vunpack.c.l.b16 %v1356
    %v1424 = vunpack.c.h.b16 %v1356
    %v1425 = vunpack.c.l.b16 %v1357
    %v1426 = vunpack.c.h.b16 %v1357
    %v1427 = vunpack.c.l.b16 %v1358
    %v1428 = vunpack.c.h.b16 %v1358
    %v1429 = vunpack.c.l.b16 %v1359
    %v1430 = vunpack.c.h.b16 %v1359
    %v1431 = vunpack.c.l.b16 %v1360
    %v1432 = vunpack.c.h.b16 %v1360
    %v1433 = vunpack.c.l.b16 %v1361
    %v1434 = vunpack.c.h.b16 %v1361
    %v1435 = vunpack.c.l.b16 %v1362
    %v1436 = vunpack.c.h.b16 %v1362
    %v1437 = vunpack.c.l.b16 %v1363
    %v1438 = vunpack.c.h.b16 %v1363
    %v1439 = vunpack.c.l.b16 %v1364
    %v1440 = vunpack.c.h.b16 %v1364
    %v1441 = vunpack.c.l.b16 %v1365
    %v1442 = vunpack.c.h.b16 %v1365
    %v1443 = vunpack.c.l.b16 %v1366
    %v1444 = vunpack.c.h.b16 %v1366
    %v1445 = vunpack.c.l.b16 %v1367
    %v1446 = vunpack.c.h.b16 %v1367
    %v1447 = vunpack.c.l.b16 %v1368
    %v1448 = vunpack.c.h.b16 %v1368
    %v1449 = vunpack.c.l.b16 %v1369
    %v1450 = vunpack.c.h.b16 %v1369
    %v1451 = vunpack.c.l.b16 %v1370
    %v1452 = vunpack.c.h.b16 %v1370
    %v1453 = vunpack.c.l.b16 %v1371
    %v1454 = vunpack.c.h.b16 %v1371
    %v1455 = vunpack.c.l.b16 %v1372
    %v1456 = vunpack.c.h.b16 %v1372
    %v1457 = vunpack.c.l.b16 %v1373
    %v1458 = vunpack.c.h.b16 %v1373
    %v1459 = vunpack.c.l.b16 %v1374
    %v1460 = vunpack.c.h.b16 %v1374
    %v1461 = vunpack.c.l.b16 %v1375
    %v1462 = vunpack.c.h.b16 %v1375
    %v1463 = vunpack.c.l.b16 %v1376
    %v1464 = vunpack.c.h.b16 %v1376
    %v1465 = vunpack.c.l.b16 %v1377
    %v1466 = vunpack.c.h.b16 %v1377
    %v1467 = vunpack.c.l.b16 %v1378
    %v1468 = vunpack.c.h.b16 %v1378
    %v1469 = vunpack.c.l.b16 %v1379
    %v1470 = vunpack.c.h.b16 %v1379
    %v1471 = vunpack.c.l.b16 %v1380
    %v1472 = vunpack.c.h.b16 %v1380
    %v1473 = vunpack.c.l.b16 %v1381
    %v1474 = vunpack.c.h.b16 %v1381
    %v1475 = vunpack.c.l.b16 %v1382
    %v1476 = vunpack.c.h.b16 %v1382
    %v1477 = vunpack.c.l.b16 %v1383
    %v1478 = vunpack.c.h.b16 %v1383
    %v1479 = vunpack.c.l.b16 %v1384
    %v1480 = vunpack.c.h.b16 %v1384
    %v1481 = vpack.c.b16 %v1419, %v1417
    %v1482 = vpack.c.b16 %v1420, %v1418
    %v1483 = vpack.c.b16 %v1423, %v1421
    %v1484 = vpack.c.b16 %v1424, %v1422
    %v1485 = vpack.c.b16 %v1427, %v1425
    %v1486 = vpack.c.b16 %v1428, %v1426
    %v1487 = vpack.c.b16 %v1431, %v1429
    %v1488 = vpack.c.b16 %v1432, %v1430
    %v1489 = vpack.c.b16 %v1435, %v1433
    %v1490 = vpack.c.b16 %v1436, %v1434
    %v1491 = vpack.c.b16 %v1439, %v1437
    %v1492 = vpack.c.b16 %v1440, %v1438
    %v1493 = vpack.c.b16 %v1443, %v1441
    %v1494 = vpack.c.b16 %v1444, %v1442
    %v1495 = vpack.c.b16 %v1447, %v1445
    %v1496 = vpack.c.b16 %v1448, %v1446
    %v1497 = vpack.c.b16 %v1451, %v1449
    %v1498 = vpack.c.b16 %v1452, %v1450
    %v1499 = vpack.c.b16 %v1455, %v1453
    %v1500 = vpack.c.b16 %v1456, %v1454
    %v1501 = vpack.c.b16 %v1459, %v1457
    %v1502 = vpack.c.b16 %v1460, %v1458
    %v1503 = vpack.c.b16 %v1463, %v1461
    %v1504 = vpack.c.b16 %v1464, %v1462
    %v1505 = vpack.c.b16 %v1467, %v1465
    %v1506 = vpack.c.b16 %v1468, %v1466
    %v1507 = vpack.c.b16 %v1471, %v1469
    %v1508 = vpack.c.b16 %v1472, %v1470
    %v1509 = vpack.c.b16 %v1475, %v1473
    %v1510 = vpack.c.b16 %v1476, %v1474
    %v1511 = vpack.c.b16 %v1479, %v1477
    %v1512 = vpack.c.b16 %v1480, %v1478
    %1545 = vmatpush.bf16.msra.mxu0 %v1495
    %1546 = vmatpush.bf16.msra.mxu0 %v1493
    %1547 = vmatpush.bf16.msra.mxu0 %v1491
    %1548 = vmatpush.bf16.msra.mxu0 %v1489
    %1549 = vmatpush.bf16.msra.mxu0 %v1487
    %1550 = vmatpush.bf16.msra.mxu0 %v1485
    %1551 = vmatpush.bf16.msra.mxu0 %v1483
    %1552 = vmatpush.bf16.msra.mxu0 %v1481
    %1553 = vmatmul.bf16.gmra.mxu0 %v1351
    %v1554 = vpop.f32.mrf.mxu0
    %v1555 = vadd.f32 0.0, %v1554
    %v1556 = vpop.f32.mrf.mxu0
    %v1557 = vadd.f32 0.0, %v1556
    %1558 = vdwg.mxu0
    %1559 = vmatpush.bf16.msra.mxu0 %v1511
    %1560 = vmatpush.bf16.msra.mxu0 %v1509
    %1561 = vmatpush.bf16.msra.mxu0 %v1507
    %1562 = vmatpush.bf16.msra.mxu0 %v1505
    %1563 = vmatpush.bf16.msra.mxu0 %v1503
    %1564 = vmatpush.bf16.msra.mxu0 %v1501
    %1565 = vmatpush.bf16.msra.mxu0 %v1499
    %1566 = vmatpush.bf16.msra.mxu0 %v1497
    %1567 = vmatmul.bf16.gmra.mxu0 %v1352
    %v1568 = vpop.f32.mrf.mxu0
    %v1569 = vadd.f32 %v1555, %v1568
    %v1570 = vpop.f32.mrf.mxu0
    %v1571 = vadd.f32 %v1557, %v1570
    %1572 = vdwg.mxu0
    %1573 = vmatpush.bf16.msra.mxu0 %v1496
    %1574 = vmatpush.bf16.msra.mxu0 %v1494
    %1575 = vmatpush.bf16.msra.mxu0 %v1492
    %1576 = vmatpush.bf16.msra.mxu0 %v1490
    %1577 = vmatpush.bf16.msra.mxu0 %v1488
    %1578 = vmatpush.bf16.msra.mxu0 %v1486
    %1579 = vmatpush.bf16.msra.mxu0 %v1484
    %1580 = vmatpush.bf16.msra.mxu0 %v1482
    %1581 = vmatmul.bf16.gmra.mxu0 %v1351
    %v1582 = vpop.f32.mrf.mxu0
    %v1583 = vadd.f32 0.0, %v1582
    %v1584 = vpop.f32.mrf.mxu0
    %v1585 = vadd.f32 0.0, %v1584
    %1586 = vdwg.mxu0
    %1587 = vmatpush.bf16.msra.mxu0 %v1512
    %1588 = vmatpush.bf16.msra.mxu0 %v1510
    %1589 = vmatpush.bf16.msra.mxu0 %v1508
    %1590 = vmatpush.bf16.msra.mxu0 %v1506
    %1591 = vmatpush.bf16.msra.mxu0 %v1504
    %1592 = vmatpush.bf16.msra.mxu0 %v1502
    %1593 = vmatpush.bf16.msra.mxu0 %v1500
    %1594 = vmatpush.bf16.msra.mxu0 %v1498
    %1595 = vmatmul.bf16.gmra.mxu0 %v1352
    %v1596 = vpop.f32.mrf.mxu0
    %v1597 = vadd.f32 %v1583, %v1596
    %v1598 = vpop.f32.mrf.mxu0
    %v1599 = vadd.f32 %v1585, %v1598
    %1600 = vdwg.mxu0
    %v1601 = vpack.c.bf16 %v1597, %v1569
    %v1602 = vpack.c.bf16 %v1599, %v1571
    %v1603 = vld [vmem:[%s8] sm:$0x3]
    %1605 = vst [vmem:[#allocation1] ss:$9 sm:$0xff] %v1603
    %v1606 = vld [vmem:[#allocation1] sm:$0xff]
    %v1607 = vld [vmem:[#allocation1 + $0x9] sm:$0xff]
    %v1608 = vpack.i.b16 %v1606, %v1606
    %v1610 = vperm.slane %v1608, 0
    %v1611 = vpack.i.b16 %v1607, %v1607
    %v1613 = vperm.slane %v1611, 0
    %v1614 = vunpack.c.l.bf16 %v1601
    %v1615 = vunpack.c.h.bf16 %v1601
    %v1616 = vunpack.c.l.bf16 %v1602
    %v1617 = vunpack.c.h.bf16 %v1602
    %v1618 = vunpack.c.l.bf16 %v1610
    %v1619 = vunpack.c.l.bf16 %v1613
    %v1620 = vadd.f32 %v1614, %v1618
    %v1621 = vadd.f32 %v1615, %v1619
    %v1622 = vadd.f32 %v1616, %v1618
    %v1623 = vadd.f32 %v1617, %v1619
    %v1624 = vpack.c.bf16 %v1621, %v1620
    %v1625 = vpack.c.bf16 %v1623, %v1622
    %v1626 = vunpack.c.l.bf16 %v1624
    %v1627 = vunpack.c.h.bf16 %v1624
    %v1628 = vunpack.c.l.bf16 %v1625
    %v1629 = vunpack.c.h.bf16 %v1625
    %v1630 = vmax.f32 %v1626, 0.0
    %v1631 = vmax.f32 %v1627, 0.0
    %v1632 = vmax.f32 %v1628, 0.0
    %v1633 = vmax.f32 %v1629, 0.0
    %v1634 = vpack.c.bf16 %v1632, %v1630
    %v1635 = vpack.c.bf16 %v1633, %v1631
    %v1636 = vld [vmem:[#allocation9] sm:$0xf]
    %v1637 = vld [vmem:[#allocation9 + $0x4] sm:$0xf]
    %v1638 = vld [vmem:[#allocation9 + $0x8] sm:$0xf]
    %v1639 = vld [vmem:[#allocation9 + $0xc] sm:$0xf]
    %v1640 = vld [vmem:[#allocation9 + $0x10] sm:$0xf]
    %v1641 = vld [vmem:[#allocation9 + $0x14] sm:$0xf]
    %v1642 = vld [vmem:[#allocation9 + $0x18] sm:$0xf]
    %v1643 = vld [vmem:[#allocation9 + $0x1c] sm:$0xf]
    %v1644 = vld [vmem:[#allocation9 + $0x20] sm:$0xf]
    %v1645 = vld [vmem:[#allocation9 + $0x24] sm:$0xf]
    %v1646 = vld [vmem:[#allocation9 + $0x28] sm:$0xf]
    %v1647 = vld [vmem:[#allocation9 + $0x2c] sm:$0xf]
    %v1648 = vld [vmem:[#allocation9 + $0x30] sm:$0xf]
    %v1649 = vld [vmem:[#allocation9 + $0x34] sm:$0xf]
    %v1650 = vld [vmem:[#allocation9 + $0x38] sm:$0xf]
    %v1651 = vld [vmem:[#allocation9 + $0x3c] sm:$0xf]
    %v1652 = vld [vmem:[#allocation9 + $0x40] sm:$0xf]
    %v1653 = vld [vmem:[#allocation9 + $0x44] sm:$0xf]
    %v1654 = vld [vmem:[#allocation9 + $0x48] sm:$0xf]
    %v1655 = vld [vmem:[#allocation9 + $0x4c] sm:$0xf]
    %v1656 = vld [vmem:[#allocation9 + $0x50] sm:$0xf]
    %v1657 = vld [vmem:[#allocation9 + $0x54] sm:$0xf]
    %v1658 = vld [vmem:[#allocation9 + $0x58] sm:$0xf]
    %v1659 = vld [vmem:[#allocation9 + $0x5c] sm:$0xf]
    %v1660 = vld [vmem:[#allocation9 + $0x60] sm:$0xf]
    %v1661 = vld [vmem:[#allocation9 + $0x64] sm:$0xf]
    %v1662 = vld [vmem:[#allocation9 + $0x68] sm:$0xf]
    %v1663 = vld [vmem:[#allocation9 + $0x6c] sm:$0xf]
    %v1664 = vld [vmem:[#allocation9 + $0x70] sm:$0xf]
    %v1665 = vld [vmem:[#allocation9 + $0x74] sm:$0xf]
    %v1666 = vld [vmem:[#allocation9 + $0x78] sm:$0xf]
    %v1667 = vld [vmem:[#allocation9 + $0x7c] sm:$0xf]
    %v1668 = vld [vmem:[%s10] sm:$0x1]
    %v1670 = vperm.slane %v1668, 0
    %v1704 = vunpack.c.l.b16 %v1636
    %v1705 = vunpack.c.l.b16 %v1637
    %v1706 = vunpack.c.l.b16 %v1638
    %v1707 = vunpack.c.l.b16 %v1639
    %v1708 = vunpack.c.l.b16 %v1640
    %v1709 = vunpack.c.l.b16 %v1641
    %v1710 = vunpack.c.l.b16 %v1642
    %v1711 = vunpack.c.l.b16 %v1643
    %v1712 = vunpack.c.l.b16 %v1644
    %v1713 = vunpack.c.l.b16 %v1645
    %v1714 = vunpack.c.l.b16 %v1646
    %v1715 = vunpack.c.l.b16 %v1647
    %v1716 = vunpack.c.l.b16 %v1648
    %v1717 = vunpack.c.l.b16 %v1649
    %v1718 = vunpack.c.l.b16 %v1650
    %v1719 = vunpack.c.l.b16 %v1651
    %v1720 = vunpack.c.l.b16 %v1652
    %v1721 = vunpack.c.l.b16 %v1653
    %v1722 = vunpack.c.l.b16 %v1654
    %v1723 = vunpack.c.l.b16 %v1655
    %v1724 = vunpack.c.l.b16 %v1656
    %v1725 = vunpack.c.l.b16 %v1657
    %v1726 = vunpack.c.l.b16 %v1658
    %v1727 = vunpack.c.l.b16 %v1659
    %v1728 = vunpack.c.l.b16 %v1660
    %v1729 = vunpack.c.l.b16 %v1661
    %v1730 = vunpack.c.l.b16 %v1662
    %v1731 = vunpack.c.l.b16 %v1663
    %v1732 = vunpack.c.l.b16 %v1664
    %v1733 = vunpack.c.l.b16 %v1665
    %v1734 = vunpack.c.l.b16 %v1666
    %v1735 = vunpack.c.l.b16 %v1667
    %v1736 = vpack.c.b16 %v1705, %v1704
    %v1737 = vpack.c.b16 %v1707, %v1706
    %v1738 = vpack.c.b16 %v1709, %v1708
    %v1739 = vpack.c.b16 %v1711, %v1710
    %v1740 = vpack.c.b16 %v1713, %v1712
    %v1741 = vpack.c.b16 %v1715, %v1714
    %v1742 = vpack.c.b16 %v1717, %v1716
    %v1743 = vpack.c.b16 %v1719, %v1718
    %v1744 = vpack.c.b16 %v1721, %v1720
    %v1745 = vpack.c.b16 %v1723, %v1722
    %v1746 = vpack.c.b16 %v1725, %v1724
    %v1747 = vpack.c.b16 %v1727, %v1726
    %v1748 = vpack.c.b16 %v1729, %v1728
    %v1749 = vpack.c.b16 %v1731, %v1730
    %v1750 = vpack.c.b16 %v1733, %v1732
    %v1751 = vpack.c.b16 %v1735, %v1734
    %1768 = vmatpush.bf16.msra.mxu0 %v1743
    %1769 = vmatpush.bf16.msra.mxu0 %v1742
    %1770 = vmatpush.bf16.msra.mxu0 %v1741
    %1771 = vmatpush.bf16.msra.mxu0 %v1740
    %1772 = vmatpush.bf16.msra.mxu0 %v1739
    %1773 = vmatpush.bf16.msra.mxu0 %v1738
    %1774 = vmatpush.bf16.msra.mxu0 %v1737
    %1775 = vmatpush.bf16.msra.mxu0 %v1736
    %1776 = vmatmul.bf16.gmra.mxu0 %v1634
    %v1777 = vpop.f32.mrf.mxu0
    %v1778 = vadd.f32 %v1670, %v1777
    %v1779 = vpop.f32.mrf.mxu0
    %v1780 = vadd.f32 %v1670, %v1779
    %1781 = vdwg.mxu0
    %1782 = vmatpush.bf16.msra.mxu0 %v1751
    %1783 = vmatpush.bf16.msra.mxu0 %v1750
    %1784 = vmatpush.bf16.msra.mxu0 %v1749
    %1785 = vmatpush.bf16.msra.mxu0 %v1748
    %1786 = vmatpush.bf16.msra.mxu0 %v1747
    %1787 = vmatpush.bf16.msra.mxu0 %v1746
    %1788 = vmatpush.bf16.msra.mxu0 %v1745
    %1789 = vmatpush.bf16.msra.mxu0 %v1744
    %1790 = vmatmul.bf16.gmra.mxu0 %v1635
    %v1791 = vpop.f32.mrf.mxu0
    %v1792 = vadd.f32 %v1778, %v1791
    %v1793 = vpop.f32.mrf.mxu0
    %v1794 = vadd.f32 %v1780, %v1793
    %1795 = vdwg.mxu0
    %1796 = vst [vmem:[%s11] sm:$0xff] %v1792
    %1797 = vst [vmem:[%s11 + $0x8] sm:$0xff] %v1794
    // Predicated region
    $region66: #{_apply_jit.1} parent=1 // pred_check
      _
    $region67: #{_apply_jit.1} parent=1 // pred_check_branch
      %1799 = sbr.rel (0) target = $region69
    $region68: #{_apply_jit.1} parent=1 // pred_region
      _
    $region69: #{_apply_jit.1} parent=1 // pred_fallthru
      _
    // Predicated region
    $region70: #{_apply_jit.1} parent=1 // pred_check
      _
    $region71: #{_apply_jit.1} parent=1 // pred_check_branch
      %1801 = sbr.rel (0) target = $region73
    $region72: #{_apply_jit.1} parent=1 // pred_region
      _
    $region73: #{_apply_jit.1} parent=1 // pred_fallthru
      _
    %1802 = vsyncpa [#allocation3], 1
    %1803 = vsyncpa [#allocation5], 1
    %1804 = vsyncpa [#allocation8], 1

</llo_original>
